<compile_context>
chip_gen: v7x
topology: tpu7x:2x2x1
jax: 0.10.0
libtpu: 0.0.40
codegen_flags: <defaults>
</compile_context>

<pallas_src>
import jax
import jax.numpy as jnp
from jax.experimental import pallas as pl
from jax.experimental.pallas import tpu as pltpu

DIMS = (768, 384, 384, 1)
LANE = 128      # final layer padded to a lane-dense 128-wide output
TB_MAX = 512    # max batch-tile rows (multiple of 128 keeps the MXU M-side full)


def mlp_kernel(x_ref, w1_ref, b1_ref, w2_ref, b2_ref, w3_ref, b3_ref, o_ref):
    # x arrives as f32 straight from HBM (single pass); cast in-register for the MXU.
    x_bf = x_ref[...].astype(jnp.bfloat16)
    # Layer 1: Linear(768 -> 384) + ReLU   (bf16 MXU matmul, f32 accumulate/epilogue)
    h1 = jnp.dot(x_bf, w1_ref[...], preferred_element_type=jnp.float32)
    h1 = jnp.maximum(h1 + b1_ref[...], 0.0)
    # Layer 2: Linear(384 -> 384) + ReLU
    h2 = jnp.dot(h1.astype(jnp.bfloat16), w2_ref[...],
                 preferred_element_type=jnp.float32)
    h2 = jnp.maximum(h2 + b2_ref[...], 0.0)
    # Layer 3: Linear(384 -> 1) padded to 128 output lanes (wrapper slices col 0).
    # Dropout(p=0.1) in eval mode == identity.
    h3 = jnp.dot(h2.astype(jnp.bfloat16), w3_ref[...],
                 preferred_element_type=jnp.float32)
    # Lane-dense bf16 store (halves HBM writeback vs f32 padded slab).
    o_ref[...] = (h3 + b3_ref[...]).astype(o_ref.dtype)


def prepare_params(params):
    """One-time packing (hoisted out of the per-call path): bf16 weights,
    128-lane padded final layer, f32 biases."""
    w1, b1, w2, b2, w3, b3 = params
    w3_p = jnp.zeros((DIMS[2], LANE), jnp.bfloat16).at[:, :DIMS[3]].set(
        w3.astype(jnp.bfloat16))
    b3_p = jnp.zeros((1, LANE), jnp.float32).at[:, :DIMS[3]].set(
        b3.astype(jnp.float32))
    return (w1.astype(jnp.bfloat16), b1.astype(jnp.float32),
            w2.astype(jnp.bfloat16), b2.astype(jnp.float32),
            w3_p, b3_p)


def _pick_batch_tile(B):
    """Tile heuristic: full-extent block for small B; otherwise 128-row-multiple tiles
    sized so the 1-D grid has >= 2 steps (keeps both v7x TensorCores busy) and is
    capped at TB_MAX to amortize per-grid-step overhead on v5e/v6e."""
    if B <= 128:
        return B
    half = pl.cdiv(B, 2)
    tb = min(TB_MAX, ((half + 127) // 128) * 128)
    return min(tb, B)


def mlp_forward(x, prepped_params):
    """x: (B, C, H, W) or (B, 768) float32. prepped_params: output of prepare_params.
    Returns (B, 1) float32."""
    if x.ndim == 4:
        x = x.reshape(x.shape[0], -1)  # same as torch .view(B, -1) (row-major)
    B = x.shape[0]
    w1, b1, w2, b2, w3p, b3p = prepped_params

    tb = _pick_batch_tile(B)
    grid = (pl.cdiv(B, tb),)

    out_padded = pl.pallas_call(
        mlp_kernel,
        out_shape=jax.ShapeDtypeStruct((B, LANE), jnp.bfloat16),
        grid=grid,
        in_specs=[
            pl.BlockSpec((tb, DIMS[0]), lambda i: (i, 0)),        # x tile (f32 in HBM)
            pl.BlockSpec((DIMS[0], DIMS[1]), lambda i: (0, 0)),   # w1 (VMEM-resident)
            pl.BlockSpec((1, DIMS[1]), lambda i: (0, 0)),         # b1
            pl.BlockSpec((DIMS[1], DIMS[2]), lambda i: (0, 0)),   # w2 (VMEM-resident)
            pl.BlockSpec((1, DIMS[2]), lambda i: (0, 0)),         # b2
            pl.BlockSpec((DIMS[2], LANE), lambda i: (0, 0)),      # w3 padded (resident)
            pl.BlockSpec((1, LANE), lambda i: (0, 0)),            # b3 padded
        ],
        out_specs=pl.BlockSpec((tb, LANE), lambda i: (i, 0)),
        compiler_params=pltpu.CompilerParams(
            dimension_semantics=("parallel",),
            vmem_limit_bytes=32 << 20,
        ),
    )(x.astype(jnp.float32), w1, b1, w2, b2, w3p, b3p)

    return out_padded[:, :DIMS[-1]].astype(jnp.float32)


def init_params(key):
    """Deterministic init matching nn.Linear's default: U(-1/sqrt(fan_in), +1/sqrt(fan_in))."""
    params = []
    for i in range(len(DIMS) - 1):
        fan_in, fan_out = DIMS[i], DIMS[i + 1]
        key, kw, kb = jax.random.split(key, 3)
        bound = 1.0 / (fan_in ** 0.5)
        w = jax.random.uniform(kw, (fan_in, fan_out), jnp.float32, -bound, bound)
        b = jax.random.uniform(kb, (1, fan_out), jnp.float32, -bound, bound)
        params.extend([w, b])
    return tuple(params)


def mlp_reference(x, params):
    """Plain-JAX f32 reference for correctness check."""
    if x.ndim == 4:
        x = x.reshape(x.shape[0], -1)
    w1, b1, w2, b2, w3, b3 = params
    h = jnp.maximum(x @ w1 + b1, 0.0)
    h = jnp.maximum(h @ w2 + b2, 0.0)
    return h @ w3 + b3


if __name__ == "__main__":
    key = jax.random.PRNGKey(0)
    k_params, k_x, k_x2 = jax.random.split(key, 3)

    params = init_params(k_params)
    prepped = prepare_params(params)           # hoisted one-time param packing

    # Main check: NCHW input whose flattened feature size is 768 (= 3 * 16 * 16).
    x = jax.random.normal(k_x, (2, 3, 16, 16), dtype=jnp.float32)
    out = jax.block_until_ready(mlp_forward(x, prepped))
    ref = mlp_reference(x, params)
    assert out.shape == (2, 1), out.shape
    # Tolerance loosened vs pure-f32: bf16 MXU operands + bf16 padded output store.
    assert jnp.allclose(out, ref, atol=5e-2, rtol=5e-2), (out, ref)

    # Secondary check: B not a multiple of the tile (multi-step grid + ragged last
    # tile with masked writeback).
    x2 = jax.random.normal(k_x2, (300, DIMS[0]), dtype=jnp.float32)
    out2 = jax.block_until_ready(mlp_forward(x2, prepped))
    ref2 = mlp_reference(x2, params)
    assert out2.shape == (300, 1), out2.shape
    assert jnp.allclose(out2, ref2, atol=5e-2, rtol=5e-2)

    print("KERNEL_OK")
</pallas_src>

<mosaic_0001>
module attributes {stable_mosaic.version = 11 : i64} {
  func.func @mlp_kernel(%arg0: i32, %arg1: memref<2x768xf32, #tpu.memory_space<vmem>>, %arg2: memref<768x384xbf16, #tpu.memory_space<vmem>>, %arg3: memref<1x384xf32, #tpu.memory_space<vmem>>, %arg4: memref<384x384xbf16, #tpu.memory_space<vmem>>, %arg5: memref<1x384xf32, #tpu.memory_space<vmem>>, %arg6: memref<384x128xbf16, #tpu.memory_space<vmem>>, %arg7: memref<1x128xf32, #tpu.memory_space<vmem>>, %arg8: memref<2x128xbf16, #tpu.memory_space<vmem>>) attributes {dimension_semantics = [#tpu.dimension_semantics<parallel>], iteration_bounds = array<i64: 1>, scalar_prefetch = 0 : i64, scratch_operands = 0 : i64, tpu.core_type = #tpu.core_type<tc>, window_params = [{transform_indices = @transform_0, window_bounds = array<i64: 2, 768>}, {pipeline_mode = #tpu.pipeline_mode<synchronous>, transform_indices = @transform_1, window_bounds = array<i64: 768, 384>}, {pipeline_mode = #tpu.pipeline_mode<synchronous>, transform_indices = @transform_2, window_bounds = array<i64: 1, 384>}, {pipeline_mode = #tpu.pipeline_mode<synchronous>, transform_indices = @transform_3, window_bounds = array<i64: 384, 384>}, {pipeline_mode = #tpu.pipeline_mode<synchronous>, transform_indices = @transform_4, window_bounds = array<i64: 1, 384>}, {pipeline_mode = #tpu.pipeline_mode<synchronous>, transform_indices = @transform_5, window_bounds = array<i64: 384, 128>}, {pipeline_mode = #tpu.pipeline_mode<synchronous>, transform_indices = @transform_6, window_bounds = array<i64: 1, 128>}, {transform_indices = @transform_7, window_bounds = array<i64: 2, 128>}]} {
    %c0 = arith.constant 0 : index
    %c0_0 = arith.constant 0 : index
    %0 = vector.load %arg1[%c0, %c0_0] : memref<2x768xf32, #tpu.memory_space<vmem>>, vector<2x768xf32>
    %1 = arith.truncf %0 : vector<2x768xf32> to vector<2x768xbf16>
    %c0_1 = arith.constant 0 : index
    %c0_2 = arith.constant 0 : index
    %2 = vector.load %arg2[%c0_1, %c0_2] : memref<768x384xbf16, #tpu.memory_space<vmem>>, vector<768x384xbf16>
    %cst = arith.constant dense<0.000000e+00> : vector<2x384xf32>
    %3 = tpu.matmul %1, %2, %cst {dimension_numbers = #tpu.dot_dimension_numbers<[1], [0], [0], [1], [0, 0, 1, 1], [], []>} : vector<2x768xbf16>, vector<768x384xbf16>, vector<2x384xf32> -> vector<2x384xf32>
    %c0_3 = arith.constant 0 : index
    %c0_4 = arith.constant 0 : index
    %4 = vector.load %arg3[%c0_3, %c0_4] : memref<1x384xf32, #tpu.memory_space<vmem>>, vector<1x384xf32>
    %5 = vector.broadcast %4 : vector<1x384xf32> to vector<2x384xf32>
    %6 = arith.addf %3, %5 : vector<2x384xf32>
    %cst_5 = arith.constant 0.000000e+00 : f32
    %7 = vector.broadcast %cst_5 : f32 to vector<2x384xf32>
    %8 = arith.maximumf %6, %7 : vector<2x384xf32>
    %9 = arith.truncf %8 : vector<2x384xf32> to vector<2x384xbf16>
    %c0_6 = arith.constant 0 : index
    %c0_7 = arith.constant 0 : index
    %10 = vector.load %arg4[%c0_6, %c0_7] : memref<384x384xbf16, #tpu.memory_space<vmem>>, vector<384x384xbf16>
    %cst_8 = arith.constant dense<0.000000e+00> : vector<2x384xf32>
    %11 = tpu.matmul %9, %10, %cst_8 {dimension_numbers = #tpu.dot_dimension_numbers<[1], [0], [0], [1], [0, 0, 1, 1], [], []>} : vector<2x384xbf16>, vector<384x384xbf16>, vector<2x384xf32> -> vector<2x384xf32>
    %c0_9 = arith.constant 0 : index
    %c0_10 = arith.constant 0 : index
    %12 = vector.load %arg5[%c0_9, %c0_10] : memref<1x384xf32, #tpu.memory_space<vmem>>, vector<1x384xf32>
    %13 = vector.broadcast %12 : vector<1x384xf32> to vector<2x384xf32>
    %14 = arith.addf %11, %13 : vector<2x384xf32>
    %cst_11 = arith.constant 0.000000e+00 : f32
    %15 = vector.broadcast %cst_11 : f32 to vector<2x384xf32>
    %16 = arith.maximumf %14, %15 : vector<2x384xf32>
    %17 = arith.truncf %16 : vector<2x384xf32> to vector<2x384xbf16>
    %c0_12 = arith.constant 0 : index
    %c0_13 = arith.constant 0 : index
    %18 = vector.load %arg6[%c0_12, %c0_13] : memref<384x128xbf16, #tpu.memory_space<vmem>>, vector<384x128xbf16>
    %cst_14 = arith.constant dense<0.000000e+00> : vector<2x128xf32>
    %19 = tpu.matmul %17, %18, %cst_14 {dimension_numbers = #tpu.dot_dimension_numbers<[1], [0], [0], [1], [0, 0, 1, 1], [], []>} : vector<2x384xbf16>, vector<384x128xbf16>, vector<2x128xf32> -> vector<2x128xf32>
    %c0_15 = arith.constant 0 : index
    %c0_16 = arith.constant 0 : index
    %20 = vector.load %arg7[%c0_15, %c0_16] : memref<1x128xf32, #tpu.memory_space<vmem>>, vector<1x128xf32>
    %21 = vector.broadcast %20 : vector<1x128xf32> to vector<2x128xf32>
    %22 = arith.addf %19, %21 : vector<2x128xf32>
    %23 = arith.truncf %22 : vector<2x128xf32> to vector<2x128xbf16>
    %c0_17 = arith.constant 0 : index
    %c0_18 = arith.constant 0 : index
    %24 = vector.load %arg8[%c0_17, %c0_18] : memref<2x128xbf16, #tpu.memory_space<vmem>>, vector<2x128xbf16>
    tpu.vector_store %arg8[%c0_17, %c0_18], %23 {strides = array<i32>} : memref<2x128xbf16, #tpu.memory_space<vmem>>, vector<2x128xbf16>,
    return
  }
  func.func @transform_0(%arg0: i32) -> (i32, i32) {
    %c0_i32 = arith.constant 0 : i32
    %c0_i32_0 = arith.constant 0 : i32
    return %arg0, %c0_i32 : i32, i32
  }
  func.func @transform_1(%arg0: i32) -> (i32, i32) {
    %c0_i32 = arith.constant 0 : i32
    %c0_i32_0 = arith.constant 0 : i32
    %c0_i32_1 = arith.constant 0 : i32
    return %c0_i32, %c0_i32_0 : i32, i32
  }
  func.func @transform_2(%arg0: i32) -> (i32, i32) {
    %c0_i32 = arith.constant 0 : i32
    %c0_i32_0 = arith.constant 0 : i32
    %c0_i32_1 = arith.constant 0 : i32
    return %c0_i32, %c0_i32_0 : i32, i32
  }
  func.func @transform_3(%arg0: i32) -> (i32, i32) {
    %c0_i32 = arith.constant 0 : i32
    %c0_i32_0 = arith.constant 0 : i32
    %c0_i32_1 = arith.constant 0 : i32
    return %c0_i32, %c0_i32_0 : i32, i32
  }
  func.func @transform_4(%arg0: i32) -> (i32, i32) {
    %c0_i32 = arith.constant 0 : i32
    %c0_i32_0 = arith.constant 0 : i32
    %c0_i32_1 = arith.constant 0 : i32
    return %c0_i32, %c0_i32_0 : i32, i32
  }
  func.func @transform_5(%arg0: i32) -> (i32, i32) {
    %c0_i32 = arith.constant 0 : i32
    %c0_i32_0 = arith.constant 0 : i32
    %c0_i32_1 = arith.constant 0 : i32
    return %c0_i32, %c0_i32_0 : i32, i32
  }
  func.func @transform_6(%arg0: i32) -> (i32, i32) {
    %c0_i32 = arith.constant 0 : i32
    %c0_i32_0 = arith.constant 0 : i32
    %c0_i32_1 = arith.constant 0 : i32
    return %c0_i32, %c0_i32_0 : i32, i32
  }
  func.func @transform_7(%arg0: i32) -> (i32, i32) {
    %c0_i32 = arith.constant 0 : i32
    %c0_i32_0 = arith.constant 0 : i32
    return %arg0, %c0_i32 : i32, i32
  }
}

</mosaic_0001>

<llo_original>
// kernel: tpu_custom_call.1
$region0: #{tpu_custom_call.1}
  #allocation0 [shape = 'u32[]', space=smem, size = 0x4, offset = 0x4, fixed_abs, tag = 'smem constant byte address 0x4 - core index']
  #allocation1 [shape = 'u32[144,128]{1,0:T(1,128)}', space=vmem, size = 0x12000, scoped, tag = 'internal scratch']
  %s0 = inlined_call_operand.hbm [shape: f32[2,768], index: 0, kind: input, shape index: {}]
  %s1 = inlined_call_operand.hbm [shape: bf16[768,384], index: 1, kind: input, shape index: {}]
  %s2 = inlined_call_operand.vmem [shape: f32[1,384], index: 2, kind: input, shape index: {}]
  %s3 = inlined_call_operand.hbm [shape: bf16[384,384], index: 3, kind: input, shape index: {}]
  %s4 = inlined_call_operand.vmem [shape: f32[1,384], index: 4, kind: input, shape index: {}]
  %s5 = inlined_call_operand.hbm [shape: bf16[384,128], index: 5, kind: input, shape index: {}]
  %s6 = inlined_call_operand.vmem [shape: f32[1,128], index: 6, kind: input, shape index: {}]
  %s7 = inlined_call_operand.hbm [shape: bf16[2,128], index: 7, kind: output, shape index: {}]
  %s8 = sld [smem:[#allocation0]]
  $region54: #{tpu_custom_call.1} parent=0
    _
  %s10 = ssub.s32 1, %s8
  %s11 = scalar_select 0, %s10, %s8
  $region1: #{tpu_custom_call.1} parent=0
    #allocation2 [shape = 'u8[6144]{0}', space=vmem, size = 0x1800, scoped, tag = 'input window, operand 0, single buffered']
    #allocation3 [shape = 's32[1]{0}', space=sflag, size = 0x4, scoped, tag = 'scoped memory for tpu_custom_call.1']
    #allocation4 [shape = 's32[1]{0}', space=sflag, size = 0x4, scoped, tag = 'scoped memory for tpu_custom_call.1']
    #allocation5 [shape = 'u8[589824]{0}', space=vmem, size = 0x90000, scoped, tag = 'input window, operand 1, single buffered']
    #allocation6 [shape = 's32[1]{0}', space=sflag, size = 0x4, scoped, tag = 'scoped memory for tpu_custom_call.1']
    #allocation7 [shape = 'u8[294912]{0}', space=vmem, size = 0x48000, scoped, tag = 'input window, operand 3, single buffered']
    #allocation8 [shape = 'u8[98304]{0}', space=vmem, size = 0x18000, scoped, tag = 'input window, operand 5, single buffered']
    #allocation9 [shape = 's32[1]{0}', space=sflag, size = 0x4, scoped, tag = 'scoped memory for tpu_custom_call.1']
    #allocation10 [shape = 'u8[512]{0}', space=vmem, size = 0x400, scoped, tag = 'output window, operand 0, single buffered']
    %12 = vsyncpa [#allocation3], 0
    %13 = vsyncpa [#allocation6], 0
    %14 = vsyncpa [#allocation9], 0
    %15 = vsyncpa [#allocation4], 0
    // Predicated region
    $region2: #{tpu_custom_call.1} parent=1 // pred_check
      _
    $region3: #{tpu_custom_call.1} parent=1 // pred_check_branch
      %17 = sbr.rel (0) target = $region5
    $region4: #{tpu_custom_call.1} parent=1 // pred_region
      %s19 = ssub.s32 192, 192
      %20 = vsyncadd [#allocation3], %s19
      %s22 = sshll.u32 [#allocation2], 4
      %s23 = int_to_ptr.vmem [resolvable:$true] %s22
      %25 = dma.hbm_to_vmem [thread:$0]  %s0, 192, %s23, [#allocation3]
    $region5: #{tpu_custom_call.1} parent=1 // pred_fallthru
      _
    // Predicated region
    $region6: #{tpu_custom_call.1} parent=1 // pred_check
      _
    $region7: #{tpu_custom_call.1} parent=1 // pred_check_branch
      %27 = sbr.rel (0) target = $region9
    $region8: #{tpu_custom_call.1} parent=1 // pred_region
      %s29 = ssub.s32 18432, 18432
      %30 = vsyncadd [#allocation6], %s29
      %s31 = sshll.u32 [#allocation5], 4
      %s32 = int_to_ptr.vmem [resolvable:$true] %s31
      %37 = dma.hbm_to_vmem [thread:$0]  %s1, 18432, %s32, [#allocation6], 192, 192, 12
    $region9: #{tpu_custom_call.1} parent=1 // pred_fallthru
      _
    // Predicated region
    $region10: #{tpu_custom_call.1} parent=1 // pred_check
      _
    $region11: #{tpu_custom_call.1} parent=1 // pred_check_branch
      %39 = sbr.rel (0) target = $region13
    $region12: #{tpu_custom_call.1} parent=1 // pred_region
      _
    $region13: #{tpu_custom_call.1} parent=1 // pred_fallthru
      _
    // Predicated region
    $region14: #{tpu_custom_call.1} parent=1 // pred_check
      _
    $region15: #{tpu_custom_call.1} parent=1 // pred_check_branch
      %41 = sbr.rel (0) target = $region17
    $region16: #{tpu_custom_call.1} parent=1 // pred_region
      %s43 = ssub.s32 9216, 9216
      %44 = vsyncadd [#allocation6], %s43
      %s45 = sshll.u32 [#allocation7], 4
      %s46 = int_to_ptr.vmem [resolvable:$true] %s45
      %51 = dma.hbm_to_vmem [thread:$0]  %s3, 9216, %s46, [#allocation6], 192, 192, 12
    $region17: #{tpu_custom_call.1} parent=1 // pred_fallthru
      _
    // Predicated region
    $region18: #{tpu_custom_call.1} parent=1 // pred_check
      _
    $region19: #{tpu_custom_call.1} parent=1 // pred_check_branch
      %53 = sbr.rel (0) target = $region21
    $region20: #{tpu_custom_call.1} parent=1 // pred_region
      _
    $region21: #{tpu_custom_call.1} parent=1 // pred_fallthru
      _
    // Predicated region
    $region22: #{tpu_custom_call.1} parent=1 // pred_check
      _
    $region23: #{tpu_custom_call.1} parent=1 // pred_check_branch
      %55 = sbr.rel (0) target = $region25
    $region24: #{tpu_custom_call.1} parent=1 // pred_region
      %s57 = ssub.s32 3072, 3072
      %58 = vsyncadd [#allocation9], %s57
      %s59 = sshll.u32 [#allocation8], 4
      %s60 = int_to_ptr.vmem [resolvable:$true] %s59
      %65 = dma.hbm_to_vmem [thread:$0]  %s5, 3072, %s60, [#allocation9], 64, 64, 4
    $region25: #{tpu_custom_call.1} parent=1 // pred_fallthru
      _
    // Predicated region
    $region26: #{tpu_custom_call.1} parent=1 // pred_check
      _
    $region27: #{tpu_custom_call.1} parent=1 // pred_check_branch
      %67 = sbr.rel (0) target = $region29
    $region28: #{tpu_custom_call.1} parent=1 // pred_region
      _
    $region29: #{tpu_custom_call.1} parent=1 // pred_fallthru
      _
    // Predicated region
    $region30: #{tpu_custom_call.1} parent=1 // pred_check
      _
    $region31: #{tpu_custom_call.1} parent=1 // pred_check_branch
      %69 = sbr.rel (0) target = $region33
    $region32: #{tpu_custom_call.1} parent=1 // pred_region
      %70 = dma.done [#allocation3], 192
    $region33: #{tpu_custom_call.1} parent=1 // pred_fallthru
      _
    // Predicated region
    $region34: #{tpu_custom_call.1} parent=1 // pred_check
      _
    $region35: #{tpu_custom_call.1} parent=1 // pred_check_branch
      %72 = sbr.rel (0) target = $region37
    $region36: #{tpu_custom_call.1} parent=1 // pred_region
      %73 = dma.done [#allocation6], 18432
    $region37: #{tpu_custom_call.1} parent=1 // pred_fallthru
      _
    // Predicated region
    $region38: #{tpu_custom_call.1} parent=1 // pred_check
      _
    $region39: #{tpu_custom_call.1} parent=1 // pred_check_branch
      %75 = sbr.rel (0) target = $region41
    $region40: #{tpu_custom_call.1} parent=1 // pred_region
      %76 = dma.done [#allocation6], 9216
    $region41: #{tpu_custom_call.1} parent=1 // pred_fallthru
      _
    // Predicated region
    $region42: #{tpu_custom_call.1} parent=1 // pred_check
      _
    $region43: #{tpu_custom_call.1} parent=1 // pred_check_branch
      %78 = sbr.rel (0) target = $region45
    $region44: #{tpu_custom_call.1} parent=1 // pred_region
      %79 = dma.done [#allocation9], 3072
    $region45: #{tpu_custom_call.1} parent=1 // pred_fallthru
      _
    %v81 = vld [vmem:[#allocation2] sm:$0xff]
    %v82 = vld [vmem:[#allocation2 + $0x8] sm:$0xf]
    %v85 = vcombine.high %v81, %v81
    %v87 = vunpack.c.l.s4 1983009808
    %v88 = vunpack.c.0.s8 %v87
    %v89 = vlaneseq
    %v90 = vshrl.u32 %v89, 7
    %v91 = vsub.s32 %v88, %v90
    %v92 = vrot.slane %v81, %v91
    %v94 = vunpack.c.l.s4 1983009808
    %v95 = vunpack.c.0.s8 %v94
    %v96 = vlaneseq
    %v97 = vshrl.u32 %v96, 7
    %v98 = vsub.s32 %v95, %v97
    %v99 = vrot.slane %v85, %v98
    %v100 = vcombine.high %v92, %v92
    %v101 = vcombine.high %v99, %v99
    %v103 = vunpack.c.l.s4 1983009808
    %v104 = vunpack.c.0.s8 %v103
    %v105 = vlaneseq
    %v106 = vshrl.u32 %v105, 7
    %v107 = vsub.s32 %v104, %v106
    %v108 = vrot.slane %v82, %v107
    %v109 = vcombine.high %v108, %v108
    %v116 = vpack.c.bf16 %v92, %v92
    %v117 = vpack.c.bf16 %v100, %v100
    %v118 = vpack.c.bf16 %v99, %v99
    %v119 = vpack.c.bf16 %v101, %v101
    %v120 = vpack.c.bf16 %v108, %v108
    %v121 = vpack.c.bf16 %v109, %v109
    %v122 = vld [vmem:[#allocation5] sm:$0xff]
    %v123 = vld [vmem:[#allocation5 + $0x8] sm:$0xf]
    %v124 = vld [vmem:[#allocation5 + $0xc] sm:$0xff]
    %v125 = vld [vmem:[#allocation5 + $0x14] sm:$0xf]
    %v126 = vld [vmem:[#allocation5 + $0x18] sm:$0xff]
    %v127 = vld [vmem:[#allocation5 + $0x20] sm:$0xf]
    %v128 = vld [vmem:[#allocation5 + $0x24] sm:$0xff]
    %v129 = vld [vmem:[#allocation5 + $0x2c] sm:$0xf]
    %v130 = vld [vmem:[#allocation5 + $0x30] sm:$0xff]
    %v131 = vld [vmem:[#allocation5 + $0x38] sm:$0xf]
    %v132 = vld [vmem:[#allocation5 + $0x3c] sm:$0xff]
    %v133 = vld [vmem:[#allocation5 + $0x44] sm:$0xf]
    %v134 = vld [vmem:[#allocation5 + $0x48] sm:$0xff]
    %v135 = vld [vmem:[#allocation5 + $0x50] sm:$0xf]
    %v136 = vld [vmem:[#allocation5 + $0x54] sm:$0xff]
    %v137 = vld [vmem:[#allocation5 + $0x5c] sm:$0xf]
    %v138 = vld [vmem:[#allocation5 + $0x60] sm:$0xff]
    %v139 = vld [vmem:[#allocation5 + $0x68] sm:$0xf]
    %v140 = vld [vmem:[#allocation5 + $0x6c] sm:$0xff]
    %v141 = vld [vmem:[#allocation5 + $0x74] sm:$0xf]
    %v142 = vld [vmem:[#allocation5 + $0x78] sm:$0xff]
    %v143 = vld [vmem:[#allocation5 + $0x80] sm:$0xf]
    %v144 = vld [vmem:[#allocation5 + $0x84] sm:$0xff]
    %v145 = vld [vmem:[#allocation5 + $0x8c] sm:$0xf]
    %v146 = vld [vmem:[#allocation5 + $0x90] sm:$0xff]
    %v147 = vld [vmem:[#allocation5 + $0x98] sm:$0xf]
    %v148 = vld [vmem:[#allocation5 + $0x9c] sm:$0xff]
    %v149 = vld [vmem:[#allocation5 + $0xa4] sm:$0xf]
    %v150 = vld [vmem:[#allocation5 + $0xa8] sm:$0xff]
    %v151 = vld [vmem:[#allocation5 + $0xb0] sm:$0xf]
    %v152 = vld [vmem:[#allocation5 + $0xb4] sm:$0xff]
    %v153 = vld [vmem:[#allocation5 + $0xbc] sm:$0xf]
    %v154 = vld [vmem:[#allocation5 + $0xc0] sm:$0xff]
    %v155 = vld [vmem:[#allocation5 + $0xc8] sm:$0xf]
    %v156 = vld [vmem:[#allocation5 + $0xcc] sm:$0xff]
    %v157 = vld [vmem:[#allocation5 + $0xd4] sm:$0xf]
    %v158 = vld [vmem:[#allocation5 + $0xd8] sm:$0xff]
    %v159 = vld [vmem:[#allocation5 + $0xe0] sm:$0xf]
    %v160 = vld [vmem:[#allocation5 + $0xe4] sm:$0xff]
    %v161 = vld [vmem:[#allocation5 + $0xec] sm:$0xf]
    %v162 = vld [vmem:[#allocation5 + $0xf0] sm:$0xff]
    %v163 = vld [vmem:[#allocation5 + $0xf8] sm:$0xf]
    %v164 = vld [vmem:[#allocation5 + $0xfc] sm:$0xff]
    %v165 = vld [vmem:[#allocation5 + $0x104] sm:$0xf]
    %v166 = vld [vmem:[#allocation5 + $0x108] sm:$0xff]
    %v167 = vld [vmem:[#allocation5 + $0x110] sm:$0xf]
    %v168 = vld [vmem:[#allocation5 + $0x114] sm:$0xff]
    %v169 = vld [vmem:[#allocation5 + $0x11c] sm:$0xf]
    %v170 = vld [vmem:[#allocation5 + $0x120] sm:$0xff]
    %v171 = vld [vmem:[#allocation5 + $0x128] sm:$0xf]
    %v172 = vld [vmem:[#allocation5 + $0x12c] sm:$0xff]
    %v173 = vld [vmem:[#allocation5 + $0x134] sm:$0xf]
    %v174 = vld [vmem:[#allocation5 + $0x138] sm:$0xff]
    %v175 = vld [vmem:[#allocation5 + $0x140] sm:$0xf]
    %v176 = vld [vmem:[#allocation5 + $0x144] sm:$0xff]
    %v177 = vld [vmem:[#allocation5 + $0x14c] sm:$0xf]
    %v178 = vld [vmem:[#allocation5 + $0x150] sm:$0xff]
    %v179 = vld [vmem:[#allocation5 + $0x158] sm:$0xf]
    %v180 = vld [vmem:[#allocation5 + $0x15c] sm:$0xff]
    %v181 = vld [vmem:[#allocation5 + $0x164] sm:$0xf]
    %v182 = vld [vmem:[#allocation5 + $0x168] sm:$0xff]
    %v183 = vld [vmem:[#allocation5 + $0x170] sm:$0xf]
    %v184 = vld [vmem:[#allocation5 + $0x174] sm:$0xff]
    %v185 = vld [vmem:[#allocation5 + $0x17c] sm:$0xf]
    %v186 = vld [vmem:[#allocation5 + $0x180] sm:$0xff]
    %v187 = vld [vmem:[#allocation5 + $0x188] sm:$0xf]
    %v188 = vld [vmem:[#allocation5 + $0x18c] sm:$0xff]
    %v189 = vld [vmem:[#allocation5 + $0x194] sm:$0xf]
    %v190 = vld [vmem:[#allocation5 + $0x198] sm:$0xff]
    %v191 = vld [vmem:[#allocation5 + $0x1a0] sm:$0xf]
    %v192 = vld [vmem:[#allocation5 + $0x1a4] sm:$0xff]
    %v193 = vld [vmem:[#allocation5 + $0x1ac] sm:$0xf]
    %v194 = vld [vmem:[#allocation5 + $0x1b0] sm:$0xff]
    %v195 = vld [vmem:[#allocation5 + $0x1b8] sm:$0xf]
    %v196 = vld [vmem:[#allocation5 + $0x1bc] sm:$0xff]
    %v197 = vld [vmem:[#allocation5 + $0x1c4] sm:$0xf]
    %v198 = vld [vmem:[#allocation5 + $0x1c8] sm:$0xff]
    %v199 = vld [vmem:[#allocation5 + $0x1d0] sm:$0xf]
    %v200 = vld [vmem:[#allocation5 + $0x1d4] sm:$0xff]
    %v201 = vld [vmem:[#allocation5 + $0x1dc] sm:$0xf]
    %v202 = vld [vmem:[#allocation5 + $0x1e0] sm:$0xff]
    %v203 = vld [vmem:[#allocation5 + $0x1e8] sm:$0xf]
    %v204 = vld [vmem:[#allocation5 + $0x1ec] sm:$0xff]
    %v205 = vld [vmem:[#allocation5 + $0x1f4] sm:$0xf]
    %v206 = vld [vmem:[#allocation5 + $0x1f8] sm:$0xff]
    %v207 = vld [vmem:[#allocation5 + $0x200] sm:$0xf]
    %v208 = vld [vmem:[#allocation5 + $0x204] sm:$0xff]
    %v209 = vld [vmem:[#allocation5 + $0x20c] sm:$0xf]
    %v210 = vld [vmem:[#allocation5 + $0x210] sm:$0xff]
    %v211 = vld [vmem:[#allocation5 + $0x218] sm:$0xf]
    %v212 = vld [vmem:[#allocation5 + $0x21c] sm:$0xff]
    %v213 = vld [vmem:[#allocation5 + $0x224] sm:$0xf]
    %v214 = vld [vmem:[#allocation5 + $0x228] sm:$0xff]
    %v215 = vld [vmem:[#allocation5 + $0x230] sm:$0xf]
    %v216 = vld [vmem:[#allocation5 + $0x234] sm:$0xff]
    %v217 = vld [vmem:[#allocation5 + $0x23c] sm:$0xf]
    %v218 = vld [vmem:[#allocation5 + $0x240] sm:$0xff]
    %v219 = vld [vmem:[#allocation5 + $0x248] sm:$0xf]
    %v220 = vld [vmem:[#allocation5 + $0x24c] sm:$0xff]
    %v221 = vld [vmem:[#allocation5 + $0x254] sm:$0xf]
    %v222 = vld [vmem:[#allocation5 + $0x258] sm:$0xff]
    %v223 = vld [vmem:[#allocation5 + $0x260] sm:$0xf]
    %v224 = vld [vmem:[#allocation5 + $0x264] sm:$0xff]
    %v225 = vld [vmem:[#allocation5 + $0x26c] sm:$0xf]
    %v226 = vld [vmem:[#allocation5 + $0x270] sm:$0xff]
    %v227 = vld [vmem:[#allocation5 + $0x278] sm:$0xf]
    %v228 = vld [vmem:[#allocation5 + $0x27c] sm:$0xff]
    %v229 = vld [vmem:[#allocation5 + $0x284] sm:$0xf]
    %v230 = vld [vmem:[#allocation5 + $0x288] sm:$0xff]
    %v231 = vld [vmem:[#allocation5 + $0x290] sm:$0xf]
    %v232 = vld [vmem:[#allocation5 + $0x294] sm:$0xff]
    %v233 = vld [vmem:[#allocation5 + $0x29c] sm:$0xf]
    %v234 = vld [vmem:[#allocation5 + $0x2a0] sm:$0xff]
    %v235 = vld [vmem:[#allocation5 + $0x2a8] sm:$0xf]
    %v236 = vld [vmem:[#allocation5 + $0x2ac] sm:$0xff]
    %v237 = vld [vmem:[#allocation5 + $0x2b4] sm:$0xf]
    %v238 = vld [vmem:[#allocation5 + $0x2b8] sm:$0xff]
    %v239 = vld [vmem:[#allocation5 + $0x2c0] sm:$0xf]
    %v240 = vld [vmem:[#allocation5 + $0x2c4] sm:$0xff]
    %v241 = vld [vmem:[#allocation5 + $0x2cc] sm:$0xf]
    %v242 = vld [vmem:[#allocation5 + $0x2d0] sm:$0xff]
    %v243 = vld [vmem:[#allocation5 + $0x2d8] sm:$0xf]
    %v244 = vld [vmem:[#allocation5 + $0x2dc] sm:$0xff]
    %v245 = vld [vmem:[#allocation5 + $0x2e4] sm:$0xf]
    %v246 = vld [vmem:[#allocation5 + $0x2e8] sm:$0xff]
    %v247 = vld [vmem:[#allocation5 + $0x2f0] sm:$0xf]
    %v248 = vld [vmem:[#allocation5 + $0x2f4] sm:$0xff]
    %v249 = vld [vmem:[#allocation5 + $0x2fc] sm:$0xf]
    %v250 = vld [vmem:[#allocation5 + $0x300] sm:$0xff]
    %v251 = vld [vmem:[#allocation5 + $0x308] sm:$0xf]
    %v252 = vld [vmem:[#allocation5 + $0x30c] sm:$0xff]
    %v253 = vld [vmem:[#allocation5 + $0x314] sm:$0xf]
    %v254 = vld [vmem:[#allocation5 + $0x318] sm:$0xff]
    %v255 = vld [vmem:[#allocation5 + $0x320] sm:$0xf]
    %v256 = vld [vmem:[#allocation5 + $0x324] sm:$0xff]
    %v257 = vld [vmem:[#allocation5 + $0x32c] sm:$0xf]
    %v258 = vld [vmem:[#allocation5 + $0x330] sm:$0xff]
    %v259 = vld [vmem:[#allocation5 + $0x338] sm:$0xf]
    %v260 = vld [vmem:[#allocation5 + $0x33c] sm:$0xff]
    %v261 = vld [vmem:[#allocation5 + $0x344] sm:$0xf]
    %v262 = vld [vmem:[#allocation5 + $0x348] sm:$0xff]
    %v263 = vld [vmem:[#allocation5 + $0x350] sm:$0xf]
    %v264 = vld [vmem:[#allocation5 + $0x354] sm:$0xff]
    %v265 = vld [vmem:[#allocation5 + $0x35c] sm:$0xf]
    %v266 = vld [vmem:[#allocation5 + $0x360] sm:$0xff]
    %v267 = vld [vmem:[#allocation5 + $0x368] sm:$0xf]
    %v268 = vld [vmem:[#allocation5 + $0x36c] sm:$0xff]
    %v269 = vld [vmem:[#allocation5 + $0x374] sm:$0xf]
    %v270 = vld [vmem:[#allocation5 + $0x378] sm:$0xff]
    %v271 = vld [vmem:[#allocation5 + $0x380] sm:$0xf]
    %v272 = vld [vmem:[#allocation5 + $0x384] sm:$0xff]
    %v273 = vld [vmem:[#allocation5 + $0x38c] sm:$0xf]
    %v274 = vld [vmem:[#allocation5 + $0x390] sm:$0xff]
    %v275 = vld [vmem:[#allocation5 + $0x398] sm:$0xf]
    %v276 = vld [vmem:[#allocation5 + $0x39c] sm:$0xff]
    %v277 = vld [vmem:[#allocation5 + $0x3a4] sm:$0xf]
    %v278 = vld [vmem:[#allocation5 + $0x3a8] sm:$0xff]
    %v279 = vld [vmem:[#allocation5 + $0x3b0] sm:$0xf]
    %v280 = vld [vmem:[#allocation5 + $0x3b4] sm:$0xff]
    %v281 = vld [vmem:[#allocation5 + $0x3bc] sm:$0xf]
    %v282 = vld [vmem:[#allocation5 + $0x3c0] sm:$0xff]
    %v283 = vld [vmem:[#allocation5 + $0x3c8] sm:$0xf]
    %v284 = vld [vmem:[#allocation5 + $0x3cc] sm:$0xff]
    %v285 = vld [vmem:[#allocation5 + $0x3d4] sm:$0xf]
    %v286 = vld [vmem:[#allocation5 + $0x3d8] sm:$0xff]
    %v287 = vld [vmem:[#allocation5 + $0x3e0] sm:$0xf]
    %v288 = vld [vmem:[#allocation5 + $0x3e4] sm:$0xff]
    %v289 = vld [vmem:[#allocation5 + $0x3ec] sm:$0xf]
    %v290 = vld [vmem:[#allocation5 + $0x3f0] sm:$0xff]
    %v291 = vld [vmem:[#allocation5 + $0x3f8] sm:$0xf]
    %v292 = vld [vmem:[#allocation5 + $0x3fc] sm:$0xff]
    %v293 = vld [vmem:[#allocation5 + $0x404] sm:$0xf]
    %v294 = vld [vmem:[#allocation5 + $0x408] sm:$0xff]
    %v295 = vld [vmem:[#allocation5 + $0x410] sm:$0xf]
    %v296 = vld [vmem:[#allocation5 + $0x414] sm:$0xff]
    %v297 = vld [vmem:[#allocation5 + $0x41c] sm:$0xf]
    %v298 = vld [vmem:[#allocation5 + $0x420] sm:$0xff]
    %v299 = vld [vmem:[#allocation5 + $0x428] sm:$0xf]
    %v300 = vld [vmem:[#allocation5 + $0x42c] sm:$0xff]
    %v301 = vld [vmem:[#allocation5 + $0x434] sm:$0xf]
    %v302 = vld [vmem:[#allocation5 + $0x438] sm:$0xff]
    %v303 = vld [vmem:[#allocation5 + $0x440] sm:$0xf]
    %v304 = vld [vmem:[#allocation5 + $0x444] sm:$0xff]
    %v305 = vld [vmem:[#allocation5 + $0x44c] sm:$0xf]
    %v306 = vld [vmem:[#allocation5 + $0x450] sm:$0xff]
    %v307 = vld [vmem:[#allocation5 + $0x458] sm:$0xf]
    %v308 = vld [vmem:[#allocation5 + $0x45c] sm:$0xff]
    %v309 = vld [vmem:[#allocation5 + $0x464] sm:$0xf]
    %v310 = vld [vmem:[#allocation5 + $0x468] sm:$0xff]
    %v311 = vld [vmem:[#allocation5 + $0x470] sm:$0xf]
    %v312 = vld [vmem:[#allocation5 + $0x474] sm:$0xff]
    %v313 = vld [vmem:[#allocation5 + $0x47c] sm:$0xf]
    %v314 = vld [vmem:[%s2] sm:$0x7]
    %v316 = vlaneseq
    %v317 = vshrl.u32 %v316, 7
    %v318 = vsub.s32 0, %v317
    %v319 = vrot.slane %v314, %v318
    %v320 = vlaneseq
    %v321 = vshrl.u32 %v320, 7
    %v322 = vsub.s32 1, %v321
    %v323 = vrot.slane %v314, %v322
    %v324 = vlaneseq
    %v325 = vshrl.u32 %v324, 7
    %v326 = vsub.s32 2, %v325
    %v327 = vrot.slane %v314, %v326
    %v523 = vunpack.c.l.b16 %v122
    %v524 = vunpack.c.h.b16 %v122
    %v525 = vunpack.c.l.b16 %v123
    %v526 = vunpack.c.l.b16 %v124
    %v527 = vunpack.c.h.b16 %v124
    %v528 = vunpack.c.l.b16 %v125
    %v529 = vunpack.c.l.b16 %v126
    %v530 = vunpack.c.h.b16 %v126
    %v531 = vunpack.c.l.b16 %v127
    %v532 = vunpack.c.l.b16 %v128
    %v533 = vunpack.c.h.b16 %v128
    %v534 = vunpack.c.l.b16 %v129
    %v535 = vunpack.c.l.b16 %v130
    %v536 = vunpack.c.h.b16 %v130
    %v537 = vunpack.c.l.b16 %v131
    %v538 = vunpack.c.l.b16 %v132
    %v539 = vunpack.c.h.b16 %v132
    %v540 = vunpack.c.l.b16 %v133
    %v541 = vunpack.c.l.b16 %v134
    %v542 = vunpack.c.h.b16 %v134
    %v543 = vunpack.c.l.b16 %v135
    %v544 = vunpack.c.l.b16 %v136
    %v545 = vunpack.c.h.b16 %v136
    %v546 = vunpack.c.l.b16 %v137
    %v547 = vunpack.c.l.b16 %v138
    %v548 = vunpack.c.h.b16 %v138
    %v549 = vunpack.c.l.b16 %v139
    %v550 = vunpack.c.l.b16 %v140
    %v551 = vunpack.c.h.b16 %v140
    %v552 = vunpack.c.l.b16 %v141
    %v553 = vunpack.c.l.b16 %v142
    %v554 = vunpack.c.h.b16 %v142
    %v555 = vunpack.c.l.b16 %v143
    %v556 = vunpack.c.l.b16 %v144
    %v557 = vunpack.c.h.b16 %v144
    %v558 = vunpack.c.l.b16 %v145
    %v559 = vunpack.c.l.b16 %v146
    %v560 = vunpack.c.h.b16 %v146
    %v561 = vunpack.c.l.b16 %v147
    %v562 = vunpack.c.l.b16 %v148
    %v563 = vunpack.c.h.b16 %v148
    %v564 = vunpack.c.l.b16 %v149
    %v565 = vunpack.c.l.b16 %v150
    %v566 = vunpack.c.h.b16 %v150
    %v567 = vunpack.c.l.b16 %v151
    %v568 = vunpack.c.l.b16 %v152
    %v569 = vunpack.c.h.b16 %v152
    %v570 = vunpack.c.l.b16 %v153
    %v571 = vunpack.c.l.b16 %v154
    %v572 = vunpack.c.h.b16 %v154
    %v573 = vunpack.c.l.b16 %v155
    %v574 = vunpack.c.l.b16 %v156
    %v575 = vunpack.c.h.b16 %v156
    %v576 = vunpack.c.l.b16 %v157
    %v577 = vunpack.c.l.b16 %v158
    %v578 = vunpack.c.h.b16 %v158
    %v579 = vunpack.c.l.b16 %v159
    %v580 = vunpack.c.l.b16 %v160
    %v581 = vunpack.c.h.b16 %v160
    %v582 = vunpack.c.l.b16 %v161
    %v583 = vunpack.c.l.b16 %v162
    %v584 = vunpack.c.h.b16 %v162
    %v585 = vunpack.c.l.b16 %v163
    %v586 = vunpack.c.l.b16 %v164
    %v587 = vunpack.c.h.b16 %v164
    %v588 = vunpack.c.l.b16 %v165
    %v589 = vunpack.c.l.b16 %v166
    %v590 = vunpack.c.h.b16 %v166
    %v591 = vunpack.c.l.b16 %v167
    %v592 = vunpack.c.l.b16 %v168
    %v593 = vunpack.c.h.b16 %v168
    %v594 = vunpack.c.l.b16 %v169
    %v595 = vunpack.c.l.b16 %v170
    %v596 = vunpack.c.h.b16 %v170
    %v597 = vunpack.c.l.b16 %v171
    %v598 = vunpack.c.l.b16 %v172
    %v599 = vunpack.c.h.b16 %v172
    %v600 = vunpack.c.l.b16 %v173
    %v601 = vunpack.c.l.b16 %v174
    %v602 = vunpack.c.h.b16 %v174
    %v603 = vunpack.c.l.b16 %v175
    %v604 = vunpack.c.l.b16 %v176
    %v605 = vunpack.c.h.b16 %v176
    %v606 = vunpack.c.l.b16 %v177
    %v607 = vunpack.c.l.b16 %v178
    %v608 = vunpack.c.h.b16 %v178
    %v609 = vunpack.c.l.b16 %v179
    %v610 = vunpack.c.l.b16 %v180
    %v611 = vunpack.c.h.b16 %v180
    %v612 = vunpack.c.l.b16 %v181
    %v613 = vunpack.c.l.b16 %v182
    %v614 = vunpack.c.h.b16 %v182
    %v615 = vunpack.c.l.b16 %v183
    %v616 = vunpack.c.l.b16 %v184
    %v617 = vunpack.c.h.b16 %v184
    %v618 = vunpack.c.l.b16 %v185
    %v619 = vunpack.c.l.b16 %v186
    %v620 = vunpack.c.h.b16 %v186
    %v621 = vunpack.c.l.b16 %v187
    %v622 = vunpack.c.l.b16 %v188
    %v623 = vunpack.c.h.b16 %v188
    %v624 = vunpack.c.l.b16 %v189
    %v625 = vunpack.c.l.b16 %v190
    %v626 = vunpack.c.h.b16 %v190
    %v627 = vunpack.c.l.b16 %v191
    %v628 = vunpack.c.l.b16 %v192
    %v629 = vunpack.c.h.b16 %v192
    %v630 = vunpack.c.l.b16 %v193
    %v631 = vunpack.c.l.b16 %v194
    %v632 = vunpack.c.h.b16 %v194
    %v633 = vunpack.c.l.b16 %v195
    %v634 = vunpack.c.l.b16 %v196
    %v635 = vunpack.c.h.b16 %v196
    %v636 = vunpack.c.l.b16 %v197
    %v637 = vunpack.c.l.b16 %v198
    %v638 = vunpack.c.h.b16 %v198
    %v639 = vunpack.c.l.b16 %v199
    %v640 = vunpack.c.l.b16 %v200
    %v641 = vunpack.c.h.b16 %v200
    %v642 = vunpack.c.l.b16 %v201
    %v643 = vunpack.c.l.b16 %v202
    %v644 = vunpack.c.h.b16 %v202
    %v645 = vunpack.c.l.b16 %v203
    %v646 = vunpack.c.l.b16 %v204
    %v647 = vunpack.c.h.b16 %v204
    %v648 = vunpack.c.l.b16 %v205
    %v649 = vunpack.c.l.b16 %v206
    %v650 = vunpack.c.h.b16 %v206
    %v651 = vunpack.c.l.b16 %v207
    %v652 = vunpack.c.l.b16 %v208
    %v653 = vunpack.c.h.b16 %v208
    %v654 = vunpack.c.l.b16 %v209
    %v655 = vunpack.c.l.b16 %v210
    %v656 = vunpack.c.h.b16 %v210
    %v657 = vunpack.c.l.b16 %v211
    %v658 = vunpack.c.l.b16 %v212
    %v659 = vunpack.c.h.b16 %v212
    %v660 = vunpack.c.l.b16 %v213
    %v661 = vunpack.c.l.b16 %v214
    %v662 = vunpack.c.h.b16 %v214
    %v663 = vunpack.c.l.b16 %v215
    %v664 = vunpack.c.l.b16 %v216
    %v665 = vunpack.c.h.b16 %v216
    %v666 = vunpack.c.l.b16 %v217
    %v667 = vunpack.c.l.b16 %v218
    %v668 = vunpack.c.h.b16 %v218
    %v669 = vunpack.c.l.b16 %v219
    %v670 = vunpack.c.l.b16 %v220
    %v671 = vunpack.c.h.b16 %v220
    %v672 = vunpack.c.l.b16 %v221
    %v673 = vunpack.c.l.b16 %v222
    %v674 = vunpack.c.h.b16 %v222
    %v675 = vunpack.c.l.b16 %v223
    %v676 = vunpack.c.l.b16 %v224
    %v677 = vunpack.c.h.b16 %v224
    %v678 = vunpack.c.l.b16 %v225
    %v679 = vunpack.c.l.b16 %v226
    %v680 = vunpack.c.h.b16 %v226
    %v681 = vunpack.c.l.b16 %v227
    %v682 = vunpack.c.l.b16 %v228
    %v683 = vunpack.c.h.b16 %v228
    %v684 = vunpack.c.l.b16 %v229
    %v685 = vunpack.c.l.b16 %v230
    %v686 = vunpack.c.h.b16 %v230
    %v687 = vunpack.c.l.b16 %v231
    %v688 = vunpack.c.l.b16 %v232
    %v689 = vunpack.c.h.b16 %v232
    %v690 = vunpack.c.l.b16 %v233
    %v691 = vunpack.c.l.b16 %v234
    %v692 = vunpack.c.h.b16 %v234
    %v693 = vunpack.c.l.b16 %v235
    %v694 = vunpack.c.l.b16 %v236
    %v695 = vunpack.c.h.b16 %v236
    %v696 = vunpack.c.l.b16 %v237
    %v697 = vunpack.c.l.b16 %v238
    %v698 = vunpack.c.h.b16 %v238
    %v699 = vunpack.c.l.b16 %v239
    %v700 = vunpack.c.l.b16 %v240
    %v701 = vunpack.c.h.b16 %v240
    %v702 = vunpack.c.l.b16 %v241
    %v703 = vunpack.c.l.b16 %v242
    %v704 = vunpack.c.h.b16 %v242
    %v705 = vunpack.c.l.b16 %v243
    %v706 = vunpack.c.l.b16 %v244
    %v707 = vunpack.c.h.b16 %v244
    %v708 = vunpack.c.l.b16 %v245
    %v709 = vunpack.c.l.b16 %v246
    %v710 = vunpack.c.h.b16 %v246
    %v711 = vunpack.c.l.b16 %v247
    %v712 = vunpack.c.l.b16 %v248
    %v713 = vunpack.c.h.b16 %v248
    %v714 = vunpack.c.l.b16 %v249
    %v715 = vunpack.c.l.b16 %v250
    %v716 = vunpack.c.h.b16 %v250
    %v717 = vunpack.c.l.b16 %v251
    %v718 = vunpack.c.l.b16 %v252
    %v719 = vunpack.c.h.b16 %v252
    %v720 = vunpack.c.l.b16 %v253
    %v721 = vunpack.c.l.b16 %v254
    %v722 = vunpack.c.h.b16 %v254
    %v723 = vunpack.c.l.b16 %v255
    %v724 = vunpack.c.l.b16 %v256
    %v725 = vunpack.c.h.b16 %v256
    %v726 = vunpack.c.l.b16 %v257
    %v727 = vunpack.c.l.b16 %v258
    %v728 = vunpack.c.h.b16 %v258
    %v729 = vunpack.c.l.b16 %v259
    %v730 = vunpack.c.l.b16 %v260
    %v731 = vunpack.c.h.b16 %v260
    %v732 = vunpack.c.l.b16 %v261
    %v733 = vunpack.c.l.b16 %v262
    %v734 = vunpack.c.h.b16 %v262
    %v735 = vunpack.c.l.b16 %v263
    %v736 = vunpack.c.l.b16 %v264
    %v737 = vunpack.c.h.b16 %v264
    %v738 = vunpack.c.l.b16 %v265
    %v739 = vunpack.c.l.b16 %v266
    %v740 = vunpack.c.h.b16 %v266
    %v741 = vunpack.c.l.b16 %v267
    %v742 = vunpack.c.l.b16 %v268
    %v743 = vunpack.c.h.b16 %v268
    %v744 = vunpack.c.l.b16 %v269
    %v745 = vunpack.c.l.b16 %v270
    %v746 = vunpack.c.h.b16 %v270
    %v747 = vunpack.c.l.b16 %v271
    %v748 = vunpack.c.l.b16 %v272
    %v749 = vunpack.c.h.b16 %v272
    %v750 = vunpack.c.l.b16 %v273
    %v751 = vunpack.c.l.b16 %v274
    %v752 = vunpack.c.h.b16 %v274
    %v753 = vunpack.c.l.b16 %v275
    %v754 = vunpack.c.l.b16 %v276
    %v755 = vunpack.c.h.b16 %v276
    %v756 = vunpack.c.l.b16 %v277
    %v757 = vunpack.c.l.b16 %v278
    %v758 = vunpack.c.h.b16 %v278
    %v759 = vunpack.c.l.b16 %v279
    %v760 = vunpack.c.l.b16 %v280
    %v761 = vunpack.c.h.b16 %v280
    %v762 = vunpack.c.l.b16 %v281
    %v763 = vunpack.c.l.b16 %v282
    %v764 = vunpack.c.h.b16 %v282
    %v765 = vunpack.c.l.b16 %v283
    %v766 = vunpack.c.l.b16 %v284
    %v767 = vunpack.c.h.b16 %v284
    %v768 = vunpack.c.l.b16 %v285
    %v769 = vunpack.c.l.b16 %v286
    %v770 = vunpack.c.h.b16 %v286
    %v771 = vunpack.c.l.b16 %v287
    %v772 = vunpack.c.l.b16 %v288
    %v773 = vunpack.c.h.b16 %v288
    %v774 = vunpack.c.l.b16 %v289
    %v775 = vunpack.c.l.b16 %v290
    %v776 = vunpack.c.h.b16 %v290
    %v777 = vunpack.c.l.b16 %v291
    %v778 = vunpack.c.l.b16 %v292
    %v779 = vunpack.c.h.b16 %v292
    %v780 = vunpack.c.l.b16 %v293
    %v781 = vunpack.c.l.b16 %v294
    %v782 = vunpack.c.h.b16 %v294
    %v783 = vunpack.c.l.b16 %v295
    %v784 = vunpack.c.l.b16 %v296
    %v785 = vunpack.c.h.b16 %v296
    %v786 = vunpack.c.l.b16 %v297
    %v787 = vunpack.c.l.b16 %v298
    %v788 = vunpack.c.h.b16 %v298
    %v789 = vunpack.c.l.b16 %v299
    %v790 = vunpack.c.l.b16 %v300
    %v791 = vunpack.c.h.b16 %v300
    %v792 = vunpack.c.l.b16 %v301
    %v793 = vunpack.c.l.b16 %v302
    %v794 = vunpack.c.h.b16 %v302
    %v795 = vunpack.c.l.b16 %v303
    %v796 = vunpack.c.l.b16 %v304
    %v797 = vunpack.c.h.b16 %v304
    %v798 = vunpack.c.l.b16 %v305
    %v799 = vunpack.c.l.b16 %v306
    %v800 = vunpack.c.h.b16 %v306
    %v801 = vunpack.c.l.b16 %v307
    %v802 = vunpack.c.l.b16 %v308
    %v803 = vunpack.c.h.b16 %v308
    %v804 = vunpack.c.l.b16 %v309
    %v805 = vunpack.c.l.b16 %v310
    %v806 = vunpack.c.h.b16 %v310
    %v807 = vunpack.c.l.b16 %v311
    %v808 = vunpack.c.l.b16 %v312
    %v809 = vunpack.c.h.b16 %v312
    %v810 = vunpack.c.l.b16 %v313
    %v811 = vpack.c.b16 %v526, %v523
    %v812 = vpack.c.b16 %v527, %v524
    %v813 = vpack.c.b16 %v528, %v525
    %v814 = vpack.c.b16 %v532, %v529
    %v815 = vpack.c.b16 %v533, %v530
    %v816 = vpack.c.b16 %v534, %v531
    %v817 = vpack.c.b16 %v538, %v535
    %v818 = vpack.c.b16 %v539, %v536
    %v819 = vpack.c.b16 %v540, %v537
    %v820 = vpack.c.b16 %v544, %v541
    %v821 = vpack.c.b16 %v545, %v542
    %v822 = vpack.c.b16 %v546, %v543
    %v823 = vpack.c.b16 %v550, %v547
    %v824 = vpack.c.b16 %v551, %v548
    %v825 = vpack.c.b16 %v552, %v549
    %v826 = vpack.c.b16 %v556, %v553
    %v827 = vpack.c.b16 %v557, %v554
    %v828 = vpack.c.b16 %v558, %v555
    %v829 = vpack.c.b16 %v562, %v559
    %v830 = vpack.c.b16 %v563, %v560
    %v831 = vpack.c.b16 %v564, %v561
    %v832 = vpack.c.b16 %v568, %v565
    %v833 = vpack.c.b16 %v569, %v566
    %v834 = vpack.c.b16 %v570, %v567
    %v835 = vpack.c.b16 %v574, %v571
    %v836 = vpack.c.b16 %v575, %v572
    %v837 = vpack.c.b16 %v576, %v573
    %v838 = vpack.c.b16 %v580, %v577
    %v839 = vpack.c.b16 %v581, %v578
    %v840 = vpack.c.b16 %v582, %v579
    %v841 = vpack.c.b16 %v586, %v583
    %v842 = vpack.c.b16 %v587, %v584
    %v843 = vpack.c.b16 %v588, %v585
    %v844 = vpack.c.b16 %v592, %v589
    %v845 = vpack.c.b16 %v593, %v590
    %v846 = vpack.c.b16 %v594, %v591
    %v847 = vpack.c.b16 %v598, %v595
    %v848 = vpack.c.b16 %v599, %v596
    %v849 = vpack.c.b16 %v600, %v597
    %v850 = vpack.c.b16 %v604, %v601
    %v851 = vpack.c.b16 %v605, %v602
    %v852 = vpack.c.b16 %v606, %v603
    %v853 = vpack.c.b16 %v610, %v607
    %v854 = vpack.c.b16 %v611, %v608
    %v855 = vpack.c.b16 %v612, %v609
    %v856 = vpack.c.b16 %v616, %v613
    %v857 = vpack.c.b16 %v617, %v614
    %v858 = vpack.c.b16 %v618, %v615
    %v859 = vpack.c.b16 %v622, %v619
    %v860 = vpack.c.b16 %v623, %v620
    %v861 = vpack.c.b16 %v624, %v621
    %v862 = vpack.c.b16 %v628, %v625
    %v863 = vpack.c.b16 %v629, %v626
    %v864 = vpack.c.b16 %v630, %v627
    %v865 = vpack.c.b16 %v634, %v631
    %v866 = vpack.c.b16 %v635, %v632
    %v867 = vpack.c.b16 %v636, %v633
    %v868 = vpack.c.b16 %v640, %v637
    %v869 = vpack.c.b16 %v641, %v638
    %v870 = vpack.c.b16 %v642, %v639
    %v871 = vpack.c.b16 %v646, %v643
    %v872 = vpack.c.b16 %v647, %v644
    %v873 = vpack.c.b16 %v648, %v645
    %v874 = vpack.c.b16 %v652, %v649
    %v875 = vpack.c.b16 %v653, %v650
    %v876 = vpack.c.b16 %v654, %v651
    %v877 = vpack.c.b16 %v658, %v655
    %v878 = vpack.c.b16 %v659, %v656
    %v879 = vpack.c.b16 %v660, %v657
    %v880 = vpack.c.b16 %v664, %v661
    %v881 = vpack.c.b16 %v665, %v662
    %v882 = vpack.c.b16 %v666, %v663
    %v883 = vpack.c.b16 %v670, %v667
    %v884 = vpack.c.b16 %v671, %v668
    %v885 = vpack.c.b16 %v672, %v669
    %v886 = vpack.c.b16 %v676, %v673
    %v887 = vpack.c.b16 %v677, %v674
    %v888 = vpack.c.b16 %v678, %v675
    %v889 = vpack.c.b16 %v682, %v679
    %v890 = vpack.c.b16 %v683, %v680
    %v891 = vpack.c.b16 %v684, %v681
    %v892 = vpack.c.b16 %v688, %v685
    %v893 = vpack.c.b16 %v689, %v686
    %v894 = vpack.c.b16 %v690, %v687
    %v895 = vpack.c.b16 %v694, %v691
    %v896 = vpack.c.b16 %v695, %v692
    %v897 = vpack.c.b16 %v696, %v693
    %v898 = vpack.c.b16 %v700, %v697
    %v899 = vpack.c.b16 %v701, %v698
    %v900 = vpack.c.b16 %v702, %v699
    %v901 = vpack.c.b16 %v706, %v703
    %v902 = vpack.c.b16 %v707, %v704
    %v903 = vpack.c.b16 %v708, %v705
    %v904 = vpack.c.b16 %v712, %v709
    %v905 = vpack.c.b16 %v713, %v710
    %v906 = vpack.c.b16 %v714, %v711
    %v907 = vpack.c.b16 %v718, %v715
    %v908 = vpack.c.b16 %v719, %v716
    %v909 = vpack.c.b16 %v720, %v717
    %v910 = vpack.c.b16 %v724, %v721
    %v911 = vpack.c.b16 %v725, %v722
    %v912 = vpack.c.b16 %v726, %v723
    %v913 = vpack.c.b16 %v730, %v727
    %v914 = vpack.c.b16 %v731, %v728
    %v915 = vpack.c.b16 %v732, %v729
    %v916 = vpack.c.b16 %v736, %v733
    %v917 = vpack.c.b16 %v737, %v734
    %v918 = vpack.c.b16 %v738, %v735
    %v919 = vpack.c.b16 %v742, %v739
    %v920 = vpack.c.b16 %v743, %v740
    %v921 = vpack.c.b16 %v744, %v741
    %v922 = vpack.c.b16 %v748, %v745
    %v923 = vpack.c.b16 %v749, %v746
    %v924 = vpack.c.b16 %v750, %v747
    %v925 = vpack.c.b16 %v754, %v751
    %v926 = vpack.c.b16 %v755, %v752
    %v927 = vpack.c.b16 %v756, %v753
    %v928 = vpack.c.b16 %v760, %v757
    %v929 = vpack.c.b16 %v761, %v758
    %v930 = vpack.c.b16 %v762, %v759
    %v931 = vpack.c.b16 %v766, %v763
    %v932 = vpack.c.b16 %v767, %v764
    %v933 = vpack.c.b16 %v768, %v765
    %v934 = vpack.c.b16 %v772, %v769
    %v935 = vpack.c.b16 %v773, %v770
    %v936 = vpack.c.b16 %v774, %v771
    %v937 = vpack.c.b16 %v778, %v775
    %v938 = vpack.c.b16 %v779, %v776
    %v939 = vpack.c.b16 %v780, %v777
    %v940 = vpack.c.b16 %v784, %v781
    %v941 = vpack.c.b16 %v785, %v782
    %v942 = vpack.c.b16 %v786, %v783
    %v943 = vpack.c.b16 %v790, %v787
    %v944 = vpack.c.b16 %v791, %v788
    %v945 = vpack.c.b16 %v792, %v789
    %v946 = vpack.c.b16 %v796, %v793
    %v947 = vpack.c.b16 %v797, %v794
    %v948 = vpack.c.b16 %v798, %v795
    %v949 = vpack.c.b16 %v802, %v799
    %v950 = vpack.c.b16 %v803, %v800
    %v951 = vpack.c.b16 %v804, %v801
    %v952 = vpack.c.b16 %v808, %v805
    %v953 = vpack.c.b16 %v809, %v806
    %v954 = vpack.c.b16 %v810, %v807
    %1099 = vmatprep.subr.bf16.mxu0 %v812
    %1100 = vmatpush1.bf16.msra.mxu0 %v811
    %1101 = vmatprep.subr.bf16.mxu0 %v815
    %1102 = vmatpush1.bf16.msra.mxu0 %v814
    %1103 = vmatprep.subr.bf16.mxu0 %v818
    %1104 = vmatpush1.bf16.msra.mxu0 %v817
    %1105 = vmatprep.subr.bf16.mxu0 %v821
    %1106 = vmatpush1.bf16.msra.mxu0 %v820
    %1107 = vmatprep.subr.bf16.mxu0 %v824
    %1108 = vmatpush1.bf16.msra.mxu0 %v823
    %1109 = vmatprep.subr.bf16.mxu0 %v827
    %1110 = vmatpush1.bf16.msra.mxu0 %v826
    %1111 = vmatprep.subr.bf16.mxu0 %v830
    %1112 = vmatpush1.bf16.msra.mxu0 %v829
    %1113 = vmatprep.subr.bf16.mxu0 %v833
    %1114 = vmatpush1.bf16.msra.mxu0 %v832
    %1115 = vmatprep.subr.bf16.mxu0 %v836
    %1116 = vmatpush1.bf16.msra.mxu0 %v835
    %1117 = vmatprep.subr.bf16.mxu0 %v839
    %1118 = vmatpush1.bf16.msra.mxu0 %v838
    %1119 = vmatprep.subr.bf16.mxu0 %v842
    %1120 = vmatpush1.bf16.msra.mxu0 %v841
    %1121 = vmatprep.subr.bf16.mxu0 %v845
    %1122 = vmatpush1.bf16.msra.mxu0 %v844
    %1123 = vmatprep.subr.bf16.mxu0 %v848
    %1124 = vmatpush1.bf16.msra.mxu0 %v847
    %1125 = vmatprep.subr.bf16.mxu0 %v851
    %1126 = vmatpush1.bf16.msra.mxu0 %v850
    %1127 = vmatprep.subr.bf16.mxu0 %v854
    %1128 = vmatpush1.bf16.msra.mxu0 %v853
    %1129 = vmatprep.subr.bf16.mxu0 %v857
    %1130 = vmatpush1.bf16.msra.mxu0 %v856
    %1131 = vmatprep.mubr.bf16.mxu0 %v117
    %1132 = vmatmul.mubr.bf16.gmra.mrb[0].mxu0 %v116
    %v1133 = vpop.f32.mrb[0].mxu0
    %v1134 = vadd.f32 %v319, %v1133
    %v1135 = vpop.f32.mrb[0].mxu0
    %v1136 = vadd.f32 %v323, %v1135
    %v1137 = vpop.f32.mrb[0].mxu0
    %v1138 = vpop.f32.mrb[0].mxu0
    %1139 = vdwg.mxu0
    %1140 = vmatprep.subr.bf16.mxu0 %v860
    %1141 = vmatpush1.bf16.msra.mxu0 %v859
    %1142 = vmatprep.subr.bf16.mxu0 %v863
    %1143 = vmatpush1.bf16.msra.mxu0 %v862
    %1144 = vmatprep.subr.bf16.mxu0 %v866
    %1145 = vmatpush1.bf16.msra.mxu0 %v865
    %1146 = vmatprep.subr.bf16.mxu0 %v869
    %1147 = vmatpush1.bf16.msra.mxu0 %v868
    %1148 = vmatprep.subr.bf16.mxu0 %v872
    %1149 = vmatpush1.bf16.msra.mxu0 %v871
    %1150 = vmatprep.subr.bf16.mxu0 %v875
    %1151 = vmatpush1.bf16.msra.mxu0 %v874
    %1152 = vmatprep.subr.bf16.mxu0 %v878
    %1153 = vmatpush1.bf16.msra.mxu0 %v877
    %1154 = vmatprep.subr.bf16.mxu0 %v881
    %1155 = vmatpush1.bf16.msra.mxu0 %v880
    %1156 = vmatprep.subr.bf16.mxu0 %v884
    %1157 = vmatpush1.bf16.msra.mxu0 %v883
    %1158 = vmatprep.subr.bf16.mxu0 %v887
    %1159 = vmatpush1.bf16.msra.mxu0 %v886
    %1160 = vmatprep.subr.bf16.mxu0 %v890
    %1161 = vmatpush1.bf16.msra.mxu0 %v889
    %1162 = vmatprep.subr.bf16.mxu0 %v893
    %1163 = vmatpush1.bf16.msra.mxu0 %v892
    %1164 = vmatprep.subr.bf16.mxu0 %v896
    %1165 = vmatpush1.bf16.msra.mxu0 %v895
    %1166 = vmatprep.subr.bf16.mxu0 %v899
    %1167 = vmatpush1.bf16.msra.mxu0 %v898
    %1168 = vmatprep.subr.bf16.mxu0 %v902
    %1169 = vmatpush1.bf16.msra.mxu0 %v901
    %1170 = vmatprep.subr.bf16.mxu0 %v905
    %1171 = vmatpush1.bf16.msra.mxu0 %v904
    %1172 = vmatprep.mubr.bf16.mxu0 %v119
    %1173 = vmatmul.mubr.bf16.gmra.mrb[0].mxu0 %v118
    %v1174 = vpop.f32.mrb[0].mxu0
    %v1175 = vadd.f32 %v1134, %v1174
    %v1176 = vpop.f32.mrb[0].mxu0
    %v1177 = vadd.f32 %v1136, %v1176
    %v1178 = vpop.f32.mrb[0].mxu0
    %v1179 = vpop.f32.mrb[0].mxu0
    %1180 = vdwg.mxu0
    %1181 = vmatprep.subr.bf16.mxu0 %v908
    %1182 = vmatpush1.bf16.msra.mxu0 %v907
    %1183 = vmatprep.subr.bf16.mxu0 %v911
    %1184 = vmatpush1.bf16.msra.mxu0 %v910
    %1185 = vmatprep.subr.bf16.mxu0 %v914
    %1186 = vmatpush1.bf16.msra.mxu0 %v913
    %1187 = vmatprep.subr.bf16.mxu0 %v917
    %1188 = vmatpush1.bf16.msra.mxu0 %v916
    %1189 = vmatprep.subr.bf16.mxu0 %v920
    %1190 = vmatpush1.bf16.msra.mxu0 %v919
    %1191 = vmatprep.subr.bf16.mxu0 %v923
    %1192 = vmatpush1.bf16.msra.mxu0 %v922
    %1193 = vmatprep.subr.bf16.mxu0 %v926
    %1194 = vmatpush1.bf16.msra.mxu0 %v925
    %1195 = vmatprep.subr.bf16.mxu0 %v929
    %1196 = vmatpush1.bf16.msra.mxu0 %v928
    %1197 = vmatprep.subr.bf16.mxu0 %v932
    %1198 = vmatpush1.bf16.msra.mxu0 %v931
    %1199 = vmatprep.subr.bf16.mxu0 %v935
    %1200 = vmatpush1.bf16.msra.mxu0 %v934
    %1201 = vmatprep.subr.bf16.mxu0 %v938
    %1202 = vmatpush1.bf16.msra.mxu0 %v937
    %1203 = vmatprep.subr.bf16.mxu0 %v941
    %1204 = vmatpush1.bf16.msra.mxu0 %v940
    %1205 = vmatprep.subr.bf16.mxu0 %v944
    %1206 = vmatpush1.bf16.msra.mxu0 %v943
    %1207 = vmatprep.subr.bf16.mxu0 %v947
    %1208 = vmatpush1.bf16.msra.mxu0 %v946
    %1209 = vmatprep.subr.bf16.mxu0 %v950
    %1210 = vmatpush1.bf16.msra.mxu0 %v949
    %1211 = vmatprep.subr.bf16.mxu0 %v953
    %1212 = vmatpush1.bf16.msra.mxu0 %v952
    %1213 = vmatprep.mubr.bf16.mxu0 %v121
    %1214 = vmatmul.mubr.bf16.gmra.mrb[0].mxu0 %v120
    %v1215 = vpop.f32.mrb[0].mxu0
    %v1216 = vadd.f32 %v1175, %v1215
    %v1217 = vpop.f32.mrb[0].mxu0
    %v1218 = vadd.f32 %v1177, %v1217
    %v1219 = vpop.f32.mrb[0].mxu0
    %v1220 = vpop.f32.mrb[0].mxu0
    %1221 = vdwg.mxu0
    %1222 = vmatprep.subr.bf16.mxu0 0
    %1223 = vmatpush1.bf16.msra.mxu0 %v813
    %1224 = vmatprep.subr.bf16.mxu0 0
    %1225 = vmatpush1.bf16.msra.mxu0 %v816
    %1226 = vmatprep.subr.bf16.mxu0 0
    %1227 = vmatpush1.bf16.msra.mxu0 %v819
    %1228 = vmatprep.subr.bf16.mxu0 0
    %1229 = vmatpush1.bf16.msra.mxu0 %v822
    %1230 = vmatprep.subr.bf16.mxu0 0
    %1231 = vmatpush1.bf16.msra.mxu0 %v825
    %1232 = vmatprep.subr.bf16.mxu0 0
    %1233 = vmatpush1.bf16.msra.mxu0 %v828
    %1234 = vmatprep.subr.bf16.mxu0 0
    %1235 = vmatpush1.bf16.msra.mxu0 %v831
    %1236 = vmatprep.subr.bf16.mxu0 0
    %1237 = vmatpush1.bf16.msra.mxu0 %v834
    %1238 = vmatprep.subr.bf16.mxu0 0
    %1239 = vmatpush1.bf16.msra.mxu0 %v837
    %1240 = vmatprep.subr.bf16.mxu0 0
    %1241 = vmatpush1.bf16.msra.mxu0 %v840
    %1242 = vmatprep.subr.bf16.mxu0 0
    %1243 = vmatpush1.bf16.msra.mxu0 %v843
    %1244 = vmatprep.subr.bf16.mxu0 0
    %1245 = vmatpush1.bf16.msra.mxu0 %v846
    %1246 = vmatprep.subr.bf16.mxu0 0
    %1247 = vmatpush1.bf16.msra.mxu0 %v849
    %1248 = vmatprep.subr.bf16.mxu0 0
    %1249 = vmatpush1.bf16.msra.mxu0 %v852
    %1250 = vmatprep.subr.bf16.mxu0 0
    %1251 = vmatpush1.bf16.msra.mxu0 %v855
    %1252 = vmatprep.subr.bf16.mxu0 0
    %1253 = vmatpush1.bf16.msra.mxu0 %v858
    %1254 = vmatprep.mubr.bf16.mxu0 %v117
    %1255 = vmatmul.mubr.bf16.gmra.mrb[0].mxu0 %v116
    %v1256 = vpop.f32.mrb[0].mxu0
    %v1257 = vadd.f32 %v327, %v1256
    %v1258 = vpop.f32.mrb[0].mxu0
    %v1259 = vpop.f32.mrb[0].mxu0
    %v1260 = vpop.f32.mrb[0].mxu0
    %1261 = vdwg.mxu0
    %1262 = vmatprep.subr.bf16.mxu0 0
    %1263 = vmatpush1.bf16.msra.mxu0 %v861
    %1264 = vmatprep.subr.bf16.mxu0 0
    %1265 = vmatpush1.bf16.msra.mxu0 %v864
    %1266 = vmatprep.subr.bf16.mxu0 0
    %1267 = vmatpush1.bf16.msra.mxu0 %v867
    %1268 = vmatprep.subr.bf16.mxu0 0
    %1269 = vmatpush1.bf16.msra.mxu0 %v870
    %1270 = vmatprep.subr.bf16.mxu0 0
    %1271 = vmatpush1.bf16.msra.mxu0 %v873
    %1272 = vmatprep.subr.bf16.mxu0 0
    %1273 = vmatpush1.bf16.msra.mxu0 %v876
    %1274 = vmatprep.subr.bf16.mxu0 0
    %1275 = vmatpush1.bf16.msra.mxu0 %v879
    %1276 = vmatprep.subr.bf16.mxu0 0
    %1277 = vmatpush1.bf16.msra.mxu0 %v882
    %1278 = vmatprep.subr.bf16.mxu0 0
    %1279 = vmatpush1.bf16.msra.mxu0 %v885
    %1280 = vmatprep.subr.bf16.mxu0 0
    %1281 = vmatpush1.bf16.msra.mxu0 %v888
    %1282 = vmatprep.subr.bf16.mxu0 0
    %1283 = vmatpush1.bf16.msra.mxu0 %v891
    %1284 = vmatprep.subr.bf16.mxu0 0
    %1285 = vmatpush1.bf16.msra.mxu0 %v894
    %1286 = vmatprep.subr.bf16.mxu0 0
    %1287 = vmatpush1.bf16.msra.mxu0 %v897
    %1288 = vmatprep.subr.bf16.mxu0 0
    %1289 = vmatpush1.bf16.msra.mxu0 %v900
    %1290 = vmatprep.subr.bf16.mxu0 0
    %1291 = vmatpush1.bf16.msra.mxu0 %v903
    %1292 = vmatprep.subr.bf16.mxu0 0
    %1293 = vmatpush1.bf16.msra.mxu0 %v906
    %1294 = vmatprep.mubr.bf16.mxu0 %v119
    %1295 = vmatmul.mubr.bf16.gmra.mrb[0].mxu0 %v118
    %v1296 = vpop.f32.mrb[0].mxu0
    %v1297 = vadd.f32 %v1257, %v1296
    %v1298 = vpop.f32.mrb[0].mxu0
    %v1299 = vpop.f32.mrb[0].mxu0
    %v1300 = vpop.f32.mrb[0].mxu0
    %1301 = vdwg.mxu0
    %1302 = vmatprep.subr.bf16.mxu0 0
    %1303 = vmatpush1.bf16.msra.mxu0 %v909
    %1304 = vmatprep.subr.bf16.mxu0 0
    %1305 = vmatpush1.bf16.msra.mxu0 %v912
    %1306 = vmatprep.subr.bf16.mxu0 0
    %1307 = vmatpush1.bf16.msra.mxu0 %v915
    %1308 = vmatprep.subr.bf16.mxu0 0
    %1309 = vmatpush1.bf16.msra.mxu0 %v918
    %1310 = vmatprep.subr.bf16.mxu0 0
    %1311 = vmatpush1.bf16.msra.mxu0 %v921
    %1312 = vmatprep.subr.bf16.mxu0 0
    %1313 = vmatpush1.bf16.msra.mxu0 %v924
    %1314 = vmatprep.subr.bf16.mxu0 0
    %1315 = vmatpush1.bf16.msra.mxu0 %v927
    %1316 = vmatprep.subr.bf16.mxu0 0
    %1317 = vmatpush1.bf16.msra.mxu0 %v930
    %1318 = vmatprep.subr.bf16.mxu0 0
    %1319 = vmatpush1.bf16.msra.mxu0 %v933
    %1320 = vmatprep.subr.bf16.mxu0 0
    %1321 = vmatpush1.bf16.msra.mxu0 %v936
    %1322 = vmatprep.subr.bf16.mxu0 0
    %1323 = vmatpush1.bf16.msra.mxu0 %v939
    %1324 = vmatprep.subr.bf16.mxu0 0
    %1325 = vmatpush1.bf16.msra.mxu0 %v942
    %1326 = vmatprep.subr.bf16.mxu0 0
    %1327 = vmatpush1.bf16.msra.mxu0 %v945
    %1328 = vmatprep.subr.bf16.mxu0 0
    %1329 = vmatpush1.bf16.msra.mxu0 %v948
    %1330 = vmatprep.subr.bf16.mxu0 0
    %1331 = vmatpush1.bf16.msra.mxu0 %v951
    %1332 = vmatprep.subr.bf16.mxu0 0
    %1333 = vmatpush1.bf16.msra.mxu0 %v954
    %1334 = vmatprep.mubr.bf16.mxu0 %v121
    %1335 = vmatmul.mubr.bf16.gmra.mrb[0].mxu0 %v120
    %v1336 = vpop.f32.mrb[0].mxu0
    %v1337 = vadd.f32 %v1297, %v1336
    %v1338 = vpop.f32.mrb[0].mxu0
    %v1339 = vpop.f32.mrb[0].mxu0
    %v1340 = vpop.f32.mrb[0].mxu0
    %1341 = vdwg.mxu0
    %v1342 = vmax.f32 %v1216, 0.0
    %v1343 = vmax.f32 %v1218, 0.0
    %v1344 = vmax.f32 %v1337, 0.0
    %v1345 = vpack.c.bf16 %v1342, %v1342
    %v1346 = vpack.c.bf16 %v1343, %v1343
    %v1347 = vpack.c.bf16 %v1344, %v1344
    %v1348 = vld [vmem:[#allocation7] sm:$0xff]
    %v1349 = vld [vmem:[#allocation7 + $0x8] sm:$0xf]
    %v1350 = vld [vmem:[#allocation7 + $0xc] sm:$0xff]
    %v1351 = vld [vmem:[#allocation7 + $0x14] sm:$0xf]
    %v1352 = vld [vmem:[#allocation7 + $0x18] sm:$0xff]
    %v1353 = vld [vmem:[#allocation7 + $0x20] sm:$0xf]
    %v1354 = vld [vmem:[#allocation7 + $0x24] sm:$0xff]
    %v1355 = vld [vmem:[#allocation7 + $0x2c] sm:$0xf]
    %v1356 = vld [vmem:[#allocation7 + $0x30] sm:$0xff]
    %v1357 = vld [vmem:[#allocation7 + $0x38] sm:$0xf]
    %v1358 = vld [vmem:[#allocation7 + $0x3c] sm:$0xff]
    %v1359 = vld [vmem:[#allocation7 + $0x44] sm:$0xf]
    %v1360 = vld [vmem:[#allocation7 + $0x48] sm:$0xff]
    %v1361 = vld [vmem:[#allocation7 + $0x50] sm:$0xf]
    %v1362 = vld [vmem:[#allocation7 + $0x54] sm:$0xff]
    %v1363 = vld [vmem:[#allocation7 + $0x5c] sm:$0xf]
    %v1364 = vld [vmem:[#allocation7 + $0x60] sm:$0xff]
    %v1365 = vld [vmem:[#allocation7 + $0x68] sm:$0xf]
    %v1366 = vld [vmem:[#allocation7 + $0x6c] sm:$0xff]
    %v1367 = vld [vmem:[#allocation7 + $0x74] sm:$0xf]
    %v1368 = vld [vmem:[#allocation7 + $0x78] sm:$0xff]
    %v1369 = vld [vmem:[#allocation7 + $0x80] sm:$0xf]
    %v1370 = vld [vmem:[#allocation7 + $0x84] sm:$0xff]
    %v1371 = vld [vmem:[#allocation7 + $0x8c] sm:$0xf]
    %v1372 = vld [vmem:[#allocation7 + $0x90] sm:$0xff]
    %v1373 = vld [vmem:[#allocation7 + $0x98] sm:$0xf]
    %v1374 = vld [vmem:[#allocation7 + $0x9c] sm:$0xff]
    %v1375 = vld [vmem:[#allocation7 + $0xa4] sm:$0xf]
    %v1376 = vld [vmem:[#allocation7 + $0xa8] sm:$0xff]
    %v1377 = vld [vmem:[#allocation7 + $0xb0] sm:$0xf]
    %v1378 = vld [vmem:[#allocation7 + $0xb4] sm:$0xff]
    %v1379 = vld [vmem:[#allocation7 + $0xbc] sm:$0xf]
    %v1380 = vld [vmem:[#allocation7 + $0xc0] sm:$0xff]
    %v1381 = vld [vmem:[#allocation7 + $0xc8] sm:$0xf]
    %v1382 = vld [vmem:[#allocation7 + $0xcc] sm:$0xff]
    %v1383 = vld [vmem:[#allocation7 + $0xd4] sm:$0xf]
    %v1384 = vld [vmem:[#allocation7 + $0xd8] sm:$0xff]
    %v1385 = vld [vmem:[#allocation7 + $0xe0] sm:$0xf]
    %v1386 = vld [vmem:[#allocation7 + $0xe4] sm:$0xff]
    %v1387 = vld [vmem:[#allocation7 + $0xec] sm:$0xf]
    %v1388 = vld [vmem:[#allocation7 + $0xf0] sm:$0xff]
    %v1389 = vld [vmem:[#allocation7 + $0xf8] sm:$0xf]
    %v1390 = vld [vmem:[#allocation7 + $0xfc] sm:$0xff]
    %v1391 = vld [vmem:[#allocation7 + $0x104] sm:$0xf]
    %v1392 = vld [vmem:[#allocation7 + $0x108] sm:$0xff]
    %v1393 = vld [vmem:[#allocation7 + $0x110] sm:$0xf]
    %v1394 = vld [vmem:[#allocation7 + $0x114] sm:$0xff]
    %v1395 = vld [vmem:[#allocation7 + $0x11c] sm:$0xf]
    %v1396 = vld [vmem:[#allocation7 + $0x120] sm:$0xff]
    %v1397 = vld [vmem:[#allocation7 + $0x128] sm:$0xf]
    %v1398 = vld [vmem:[#allocation7 + $0x12c] sm:$0xff]
    %v1399 = vld [vmem:[#allocation7 + $0x134] sm:$0xf]
    %v1400 = vld [vmem:[#allocation7 + $0x138] sm:$0xff]
    %v1401 = vld [vmem:[#allocation7 + $0x140] sm:$0xf]
    %v1402 = vld [vmem:[#allocation7 + $0x144] sm:$0xff]
    %v1403 = vld [vmem:[#allocation7 + $0x14c] sm:$0xf]
    %v1404 = vld [vmem:[#allocation7 + $0x150] sm:$0xff]
    %v1405 = vld [vmem:[#allocation7 + $0x158] sm:$0xf]
    %v1406 = vld [vmem:[#allocation7 + $0x15c] sm:$0xff]
    %v1407 = vld [vmem:[#allocation7 + $0x164] sm:$0xf]
    %v1408 = vld [vmem:[#allocation7 + $0x168] sm:$0xff]
    %v1409 = vld [vmem:[#allocation7 + $0x170] sm:$0xf]
    %v1410 = vld [vmem:[#allocation7 + $0x174] sm:$0xff]
    %v1411 = vld [vmem:[#allocation7 + $0x17c] sm:$0xf]
    %v1412 = vld [vmem:[#allocation7 + $0x180] sm:$0xff]
    %v1413 = vld [vmem:[#allocation7 + $0x188] sm:$0xf]
    %v1414 = vld [vmem:[#allocation7 + $0x18c] sm:$0xff]
    %v1415 = vld [vmem:[#allocation7 + $0x194] sm:$0xf]
    %v1416 = vld [vmem:[#allocation7 + $0x198] sm:$0xff]
    %v1417 = vld [vmem:[#allocation7 + $0x1a0] sm:$0xf]
    %v1418 = vld [vmem:[#allocation7 + $0x1a4] sm:$0xff]
    %v1419 = vld [vmem:[#allocation7 + $0x1ac] sm:$0xf]
    %v1420 = vld [vmem:[#allocation7 + $0x1b0] sm:$0xff]
    %v1421 = vld [vmem:[#allocation7 + $0x1b8] sm:$0xf]
    %v1422 = vld [vmem:[#allocation7 + $0x1bc] sm:$0xff]
    %v1423 = vld [vmem:[#allocation7 + $0x1c4] sm:$0xf]
    %v1424 = vld [vmem:[#allocation7 + $0x1c8] sm:$0xff]
    %v1425 = vld [vmem:[#allocation7 + $0x1d0] sm:$0xf]
    %v1426 = vld [vmem:[#allocation7 + $0x1d4] sm:$0xff]
    %v1427 = vld [vmem:[#allocation7 + $0x1dc] sm:$0xf]
    %v1428 = vld [vmem:[#allocation7 + $0x1e0] sm:$0xff]
    %v1429 = vld [vmem:[#allocation7 + $0x1e8] sm:$0xf]
    %v1430 = vld [vmem:[#allocation7 + $0x1ec] sm:$0xff]
    %v1431 = vld [vmem:[#allocation7 + $0x1f4] sm:$0xf]
    %v1432 = vld [vmem:[#allocation7 + $0x1f8] sm:$0xff]
    %v1433 = vld [vmem:[#allocation7 + $0x200] sm:$0xf]
    %v1434 = vld [vmem:[#allocation7 + $0x204] sm:$0xff]
    %v1435 = vld [vmem:[#allocation7 + $0x20c] sm:$0xf]
    %v1436 = vld [vmem:[#allocation7 + $0x210] sm:$0xff]
    %v1437 = vld [vmem:[#allocation7 + $0x218] sm:$0xf]
    %v1438 = vld [vmem:[#allocation7 + $0x21c] sm:$0xff]
    %v1439 = vld [vmem:[#allocation7 + $0x224] sm:$0xf]
    %v1440 = vld [vmem:[#allocation7 + $0x228] sm:$0xff]
    %v1441 = vld [vmem:[#allocation7 + $0x230] sm:$0xf]
    %v1442 = vld [vmem:[#allocation7 + $0x234] sm:$0xff]
    %v1443 = vld [vmem:[#allocation7 + $0x23c] sm:$0xf]
    %v1444 = vld [vmem:[%s4] sm:$0x7]
    %v1446 = vlaneseq
    %v1447 = vshrl.u32 %v1446, 7
    %v1448 = vsub.s32 0, %v1447
    %v1449 = vrot.slane %v1444, %v1448
    %v1450 = vlaneseq
    %v1451 = vshrl.u32 %v1450, 7
    %v1452 = vsub.s32 1, %v1451
    %v1453 = vrot.slane %v1444, %v1452
    %v1454 = vlaneseq
    %v1455 = vshrl.u32 %v1454, 7
    %v1456 = vsub.s32 2, %v1455
    %v1457 = vrot.slane %v1444, %v1456
    %v1557 = vunpack.c.l.b16 %v1348
    %v1558 = vunpack.c.h.b16 %v1348
    %v1559 = vunpack.c.l.b16 %v1349
    %v1560 = vunpack.c.l.b16 %v1350
    %v1561 = vunpack.c.h.b16 %v1350
    %v1562 = vunpack.c.l.b16 %v1351
    %v1563 = vunpack.c.l.b16 %v1352
    %v1564 = vunpack.c.h.b16 %v1352
    %v1565 = vunpack.c.l.b16 %v1353
    %v1566 = vunpack.c.l.b16 %v1354
    %v1567 = vunpack.c.h.b16 %v1354
    %v1568 = vunpack.c.l.b16 %v1355
    %v1569 = vunpack.c.l.b16 %v1356
    %v1570 = vunpack.c.h.b16 %v1356
    %v1571 = vunpack.c.l.b16 %v1357
    %v1572 = vunpack.c.l.b16 %v1358
    %v1573 = vunpack.c.h.b16 %v1358
    %v1574 = vunpack.c.l.b16 %v1359
    %v1575 = vunpack.c.l.b16 %v1360
    %v1576 = vunpack.c.h.b16 %v1360
    %v1577 = vunpack.c.l.b16 %v1361
    %v1578 = vunpack.c.l.b16 %v1362
    %v1579 = vunpack.c.h.b16 %v1362
    %v1580 = vunpack.c.l.b16 %v1363
    %v1581 = vunpack.c.l.b16 %v1364
    %v1582 = vunpack.c.h.b16 %v1364
    %v1583 = vunpack.c.l.b16 %v1365
    %v1584 = vunpack.c.l.b16 %v1366
    %v1585 = vunpack.c.h.b16 %v1366
    %v1586 = vunpack.c.l.b16 %v1367
    %v1587 = vunpack.c.l.b16 %v1368
    %v1588 = vunpack.c.h.b16 %v1368
    %v1589 = vunpack.c.l.b16 %v1369
    %v1590 = vunpack.c.l.b16 %v1370
    %v1591 = vunpack.c.h.b16 %v1370
    %v1592 = vunpack.c.l.b16 %v1371
    %v1593 = vunpack.c.l.b16 %v1372
    %v1594 = vunpack.c.h.b16 %v1372
    %v1595 = vunpack.c.l.b16 %v1373
    %v1596 = vunpack.c.l.b16 %v1374
    %v1597 = vunpack.c.h.b16 %v1374
    %v1598 = vunpack.c.l.b16 %v1375
    %v1599 = vunpack.c.l.b16 %v1376
    %v1600 = vunpack.c.h.b16 %v1376
    %v1601 = vunpack.c.l.b16 %v1377
    %v1602 = vunpack.c.l.b16 %v1378
    %v1603 = vunpack.c.h.b16 %v1378
    %v1604 = vunpack.c.l.b16 %v1379
    %v1605 = vunpack.c.l.b16 %v1380
    %v1606 = vunpack.c.h.b16 %v1380
    %v1607 = vunpack.c.l.b16 %v1381
    %v1608 = vunpack.c.l.b16 %v1382
    %v1609 = vunpack.c.h.b16 %v1382
    %v1610 = vunpack.c.l.b16 %v1383
    %v1611 = vunpack.c.l.b16 %v1384
    %v1612 = vunpack.c.h.b16 %v1384
    %v1613 = vunpack.c.l.b16 %v1385
    %v1614 = vunpack.c.l.b16 %v1386
    %v1615 = vunpack.c.h.b16 %v1386
    %v1616 = vunpack.c.l.b16 %v1387
    %v1617 = vunpack.c.l.b16 %v1388
    %v1618 = vunpack.c.h.b16 %v1388
    %v1619 = vunpack.c.l.b16 %v1389
    %v1620 = vunpack.c.l.b16 %v1390
    %v1621 = vunpack.c.h.b16 %v1390
    %v1622 = vunpack.c.l.b16 %v1391
    %v1623 = vunpack.c.l.b16 %v1392
    %v1624 = vunpack.c.h.b16 %v1392
    %v1625 = vunpack.c.l.b16 %v1393
    %v1626 = vunpack.c.l.b16 %v1394
    %v1627 = vunpack.c.h.b16 %v1394
    %v1628 = vunpack.c.l.b16 %v1395
    %v1629 = vunpack.c.l.b16 %v1396
    %v1630 = vunpack.c.h.b16 %v1396
    %v1631 = vunpack.c.l.b16 %v1397
    %v1632 = vunpack.c.l.b16 %v1398
    %v1633 = vunpack.c.h.b16 %v1398
    %v1634 = vunpack.c.l.b16 %v1399
    %v1635 = vunpack.c.l.b16 %v1400
    %v1636 = vunpack.c.h.b16 %v1400
    %v1637 = vunpack.c.l.b16 %v1401
    %v1638 = vunpack.c.l.b16 %v1402
    %v1639 = vunpack.c.h.b16 %v1402
    %v1640 = vunpack.c.l.b16 %v1403
    %v1641 = vunpack.c.l.b16 %v1404
    %v1642 = vunpack.c.h.b16 %v1404
    %v1643 = vunpack.c.l.b16 %v1405
    %v1644 = vunpack.c.l.b16 %v1406
    %v1645 = vunpack.c.h.b16 %v1406
    %v1646 = vunpack.c.l.b16 %v1407
    %v1647 = vunpack.c.l.b16 %v1408
    %v1648 = vunpack.c.h.b16 %v1408
    %v1649 = vunpack.c.l.b16 %v1409
    %v1650 = vunpack.c.l.b16 %v1410
    %v1651 = vunpack.c.h.b16 %v1410
    %v1652 = vunpack.c.l.b16 %v1411
    %v1653 = vunpack.c.l.b16 %v1412
    %v1654 = vunpack.c.h.b16 %v1412
    %v1655 = vunpack.c.l.b16 %v1413
    %v1656 = vunpack.c.l.b16 %v1414
    %v1657 = vunpack.c.h.b16 %v1414
    %v1658 = vunpack.c.l.b16 %v1415
    %v1659 = vunpack.c.l.b16 %v1416
    %v1660 = vunpack.c.h.b16 %v1416
    %v1661 = vunpack.c.l.b16 %v1417
    %v1662 = vunpack.c.l.b16 %v1418
    %v1663 = vunpack.c.h.b16 %v1418
    %v1664 = vunpack.c.l.b16 %v1419
    %v1665 = vunpack.c.l.b16 %v1420
    %v1666 = vunpack.c.h.b16 %v1420
    %v1667 = vunpack.c.l.b16 %v1421
    %v1668 = vunpack.c.l.b16 %v1422
    %v1669 = vunpack.c.h.b16 %v1422
    %v1670 = vunpack.c.l.b16 %v1423
    %v1671 = vunpack.c.l.b16 %v1424
    %v1672 = vunpack.c.h.b16 %v1424
    %v1673 = vunpack.c.l.b16 %v1425
    %v1674 = vunpack.c.l.b16 %v1426
    %v1675 = vunpack.c.h.b16 %v1426
    %v1676 = vunpack.c.l.b16 %v1427
    %v1677 = vunpack.c.l.b16 %v1428
    %v1678 = vunpack.c.h.b16 %v1428
    %v1679 = vunpack.c.l.b16 %v1429
    %v1680 = vunpack.c.l.b16 %v1430
    %v1681 = vunpack.c.h.b16 %v1430
    %v1682 = vunpack.c.l.b16 %v1431
    %v1683 = vunpack.c.l.b16 %v1432
    %v1684 = vunpack.c.h.b16 %v1432
    %v1685 = vunpack.c.l.b16 %v1433
    %v1686 = vunpack.c.l.b16 %v1434
    %v1687 = vunpack.c.h.b16 %v1434
    %v1688 = vunpack.c.l.b16 %v1435
    %v1689 = vunpack.c.l.b16 %v1436
    %v1690 = vunpack.c.h.b16 %v1436
    %v1691 = vunpack.c.l.b16 %v1437
    %v1692 = vunpack.c.l.b16 %v1438
    %v1693 = vunpack.c.h.b16 %v1438
    %v1694 = vunpack.c.l.b16 %v1439
    %v1695 = vunpack.c.l.b16 %v1440
    %v1696 = vunpack.c.h.b16 %v1440
    %v1697 = vunpack.c.l.b16 %v1441
    %v1698 = vunpack.c.l.b16 %v1442
    %v1699 = vunpack.c.h.b16 %v1442
    %v1700 = vunpack.c.l.b16 %v1443
    %v1701 = vpack.c.b16 %v1560, %v1557
    %v1702 = vpack.c.b16 %v1561, %v1558
    %v1703 = vpack.c.b16 %v1562, %v1559
    %v1704 = vpack.c.b16 %v1566, %v1563
    %v1705 = vpack.c.b16 %v1567, %v1564
    %v1706 = vpack.c.b16 %v1568, %v1565
    %v1707 = vpack.c.b16 %v1572, %v1569
    %v1708 = vpack.c.b16 %v1573, %v1570
    %v1709 = vpack.c.b16 %v1574, %v1571
    %v1710 = vpack.c.b16 %v1578, %v1575
    %v1711 = vpack.c.b16 %v1579, %v1576
    %v1712 = vpack.c.b16 %v1580, %v1577
    %v1713 = vpack.c.b16 %v1584, %v1581
    %v1714 = vpack.c.b16 %v1585, %v1582
    %v1715 = vpack.c.b16 %v1586, %v1583
    %v1716 = vpack.c.b16 %v1590, %v1587
    %v1717 = vpack.c.b16 %v1591, %v1588
    %v1718 = vpack.c.b16 %v1592, %v1589
    %v1719 = vpack.c.b16 %v1596, %v1593
    %v1720 = vpack.c.b16 %v1597, %v1594
    %v1721 = vpack.c.b16 %v1598, %v1595
    %v1722 = vpack.c.b16 %v1602, %v1599
    %v1723 = vpack.c.b16 %v1603, %v1600
    %v1724 = vpack.c.b16 %v1604, %v1601
    %v1725 = vpack.c.b16 %v1608, %v1605
    %v1726 = vpack.c.b16 %v1609, %v1606
    %v1727 = vpack.c.b16 %v1610, %v1607
    %v1728 = vpack.c.b16 %v1614, %v1611
    %v1729 = vpack.c.b16 %v1615, %v1612
    %v1730 = vpack.c.b16 %v1616, %v1613
    %v1731 = vpack.c.b16 %v1620, %v1617
    %v1732 = vpack.c.b16 %v1621, %v1618
    %v1733 = vpack.c.b16 %v1622, %v1619
    %v1734 = vpack.c.b16 %v1626, %v1623
    %v1735 = vpack.c.b16 %v1627, %v1624
    %v1736 = vpack.c.b16 %v1628, %v1625
    %v1737 = vpack.c.b16 %v1632, %v1629
    %v1738 = vpack.c.b16 %v1633, %v1630
    %v1739 = vpack.c.b16 %v1634, %v1631
    %v1740 = vpack.c.b16 %v1638, %v1635
    %v1741 = vpack.c.b16 %v1639, %v1636
    %v1742 = vpack.c.b16 %v1640, %v1637
    %v1743 = vpack.c.b16 %v1644, %v1641
    %v1744 = vpack.c.b16 %v1645, %v1642
    %v1745 = vpack.c.b16 %v1646, %v1643
    %v1746 = vpack.c.b16 %v1650, %v1647
    %v1747 = vpack.c.b16 %v1651, %v1648
    %v1748 = vpack.c.b16 %v1652, %v1649
    %v1749 = vpack.c.b16 %v1656, %v1653
    %v1750 = vpack.c.b16 %v1657, %v1654
    %v1751 = vpack.c.b16 %v1658, %v1655
    %v1752 = vpack.c.b16 %v1662, %v1659
    %v1753 = vpack.c.b16 %v1663, %v1660
    %v1754 = vpack.c.b16 %v1664, %v1661
    %v1755 = vpack.c.b16 %v1668, %v1665
    %v1756 = vpack.c.b16 %v1669, %v1666
    %v1757 = vpack.c.b16 %v1670, %v1667
    %v1758 = vpack.c.b16 %v1674, %v1671
    %v1759 = vpack.c.b16 %v1675, %v1672
    %v1760 = vpack.c.b16 %v1676, %v1673
    %v1761 = vpack.c.b16 %v1680, %v1677
    %v1762 = vpack.c.b16 %v1681, %v1678
    %v1763 = vpack.c.b16 %v1682, %v1679
    %v1764 = vpack.c.b16 %v1686, %v1683
    %v1765 = vpack.c.b16 %v1687, %v1684
    %v1766 = vpack.c.b16 %v1688, %v1685
    %v1767 = vpack.c.b16 %v1692, %v1689
    %v1768 = vpack.c.b16 %v1693, %v1690
    %v1769 = vpack.c.b16 %v1694, %v1691
    %v1770 = vpack.c.b16 %v1698, %v1695
    %v1771 = vpack.c.b16 %v1699, %v1696
    %v1772 = vpack.c.b16 %v1700, %v1697
    %1845 = vmatprep.subr.bf16.mxu0 %v1702
    %1846 = vmatpush1.bf16.msra.mxu0 %v1701
    %1847 = vmatprep.subr.bf16.mxu0 %v1705
    %1848 = vmatpush1.bf16.msra.mxu0 %v1704
    %1849 = vmatprep.subr.bf16.mxu0 %v1708
    %1850 = vmatpush1.bf16.msra.mxu0 %v1707
    %1851 = vmatprep.subr.bf16.mxu0 %v1711
    %1852 = vmatpush1.bf16.msra.mxu0 %v1710
    %1853 = vmatprep.subr.bf16.mxu0 %v1714
    %1854 = vmatpush1.bf16.msra.mxu0 %v1713
    %1855 = vmatprep.subr.bf16.mxu0 %v1717
    %1856 = vmatpush1.bf16.msra.mxu0 %v1716
    %1857 = vmatprep.subr.bf16.mxu0 %v1720
    %1858 = vmatpush1.bf16.msra.mxu0 %v1719
    %1859 = vmatprep.subr.bf16.mxu0 %v1723
    %1860 = vmatpush1.bf16.msra.mxu0 %v1722
    %1861 = vmatprep.subr.bf16.mxu0 %v1726
    %1862 = vmatpush1.bf16.msra.mxu0 %v1725
    %1863 = vmatprep.subr.bf16.mxu0 %v1729
    %1864 = vmatpush1.bf16.msra.mxu0 %v1728
    %1865 = vmatprep.subr.bf16.mxu0 %v1732
    %1866 = vmatpush1.bf16.msra.mxu0 %v1731
    %1867 = vmatprep.subr.bf16.mxu0 %v1735
    %1868 = vmatpush1.bf16.msra.mxu0 %v1734
    %1869 = vmatprep.subr.bf16.mxu0 %v1738
    %1870 = vmatpush1.bf16.msra.mxu0 %v1737
    %1871 = vmatprep.subr.bf16.mxu0 %v1741
    %1872 = vmatpush1.bf16.msra.mxu0 %v1740
    %1873 = vmatprep.subr.bf16.mxu0 %v1744
    %1874 = vmatpush1.bf16.msra.mxu0 %v1743
    %1875 = vmatprep.subr.bf16.mxu0 %v1747
    %1876 = vmatpush1.bf16.msra.mxu0 %v1746
    %1877 = vmatprep.mubr.bf16.mxu0 %v1346
    %1878 = vmatmul.mubr.bf16.gmra.mrb[0].mxu0 %v1345
    %v1879 = vpop.f32.mrb[0].mxu0
    %v1880 = vadd.f32 %v1449, %v1879
    %v1881 = vpop.f32.mrb[0].mxu0
    %v1882 = vadd.f32 %v1453, %v1881
    %v1883 = vpop.f32.mrb[0].mxu0
    %v1884 = vpop.f32.mrb[0].mxu0
    %1885 = vdwg.mxu0
    %1886 = vmatprep.subr.bf16.mxu0 %v1750
    %1887 = vmatpush1.bf16.msra.mxu0 %v1749
    %1888 = vmatprep.subr.bf16.mxu0 %v1753
    %1889 = vmatpush1.bf16.msra.mxu0 %v1752
    %1890 = vmatprep.subr.bf16.mxu0 %v1756
    %1891 = vmatpush1.bf16.msra.mxu0 %v1755
    %1892 = vmatprep.subr.bf16.mxu0 %v1759
    %1893 = vmatpush1.bf16.msra.mxu0 %v1758
    %1894 = vmatprep.subr.bf16.mxu0 %v1762
    %1895 = vmatpush1.bf16.msra.mxu0 %v1761
    %1896 = vmatprep.subr.bf16.mxu0 %v1765
    %1897 = vmatpush1.bf16.msra.mxu0 %v1764
    %1898 = vmatprep.subr.bf16.mxu0 %v1768
    %1899 = vmatpush1.bf16.msra.mxu0 %v1767
    %1900 = vmatprep.subr.bf16.mxu0 %v1771
    %1901 = vmatpush1.bf16.msra.mxu0 %v1770
    %1902 = vmatprep.subr.bf16.mxu0 0
    %1903 = vmatpush1.bf16.msra.mxu0 0
    %1904 = vmatprep.subr.bf16.mxu0 0
    %1905 = vmatpush1.bf16.msra.mxu0 0
    %1906 = vmatprep.subr.bf16.mxu0 0
    %1907 = vmatpush1.bf16.msra.mxu0 0
    %1908 = vmatprep.subr.bf16.mxu0 0
    %1909 = vmatpush1.bf16.msra.mxu0 0
    %1910 = vmatprep.subr.bf16.mxu0 0
    %1911 = vmatpush1.bf16.msra.mxu0 0
    %1912 = vmatprep.subr.bf16.mxu0 0
    %1913 = vmatpush1.bf16.msra.mxu0 0
    %1914 = vmatprep.subr.bf16.mxu0 0
    %1915 = vmatpush1.bf16.msra.mxu0 0
    %1916 = vmatprep.subr.bf16.mxu0 0
    %1917 = vmatpush1.bf16.msra.mxu0 0
    %1918 = vmatprep.mubr.bf16.mxu0 0
    %1919 = vmatmul.mubr.bf16.gmra.mrb[0].mxu0 %v1347
    %v1920 = vpop.f32.mrb[0].mxu0
    %v1921 = vadd.f32 %v1880, %v1920
    %v1922 = vpop.f32.mrb[0].mxu0
    %v1923 = vadd.f32 %v1882, %v1922
    %v1924 = vpop.f32.mrb[0].mxu0
    %v1925 = vpop.f32.mrb[0].mxu0
    %1926 = vdwg.mxu0
    %1927 = vmatprep.subr.bf16.mxu0 0
    %1928 = vmatpush1.bf16.msra.mxu0 %v1703
    %1929 = vmatprep.subr.bf16.mxu0 0
    %1930 = vmatpush1.bf16.msra.mxu0 %v1706
    %1931 = vmatprep.subr.bf16.mxu0 0
    %1932 = vmatpush1.bf16.msra.mxu0 %v1709
    %1933 = vmatprep.subr.bf16.mxu0 0
    %1934 = vmatpush1.bf16.msra.mxu0 %v1712
    %1935 = vmatprep.subr.bf16.mxu0 0
    %1936 = vmatpush1.bf16.msra.mxu0 %v1715
    %1937 = vmatprep.subr.bf16.mxu0 0
    %1938 = vmatpush1.bf16.msra.mxu0 %v1718
    %1939 = vmatprep.subr.bf16.mxu0 0
    %1940 = vmatpush1.bf16.msra.mxu0 %v1721
    %1941 = vmatprep.subr.bf16.mxu0 0
    %1942 = vmatpush1.bf16.msra.mxu0 %v1724
    %1943 = vmatprep.subr.bf16.mxu0 0
    %1944 = vmatpush1.bf16.msra.mxu0 %v1727
    %1945 = vmatprep.subr.bf16.mxu0 0
    %1946 = vmatpush1.bf16.msra.mxu0 %v1730
    %1947 = vmatprep.subr.bf16.mxu0 0
    %1948 = vmatpush1.bf16.msra.mxu0 %v1733
    %1949 = vmatprep.subr.bf16.mxu0 0
    %1950 = vmatpush1.bf16.msra.mxu0 %v1736
    %1951 = vmatprep.subr.bf16.mxu0 0
    %1952 = vmatpush1.bf16.msra.mxu0 %v1739
    %1953 = vmatprep.subr.bf16.mxu0 0
    %1954 = vmatpush1.bf16.msra.mxu0 %v1742
    %1955 = vmatprep.subr.bf16.mxu0 0
    %1956 = vmatpush1.bf16.msra.mxu0 %v1745
    %1957 = vmatprep.subr.bf16.mxu0 0
    %1958 = vmatpush1.bf16.msra.mxu0 %v1748
    %1959 = vmatprep.mubr.bf16.mxu0 %v1346
    %1960 = vmatmul.mubr.bf16.gmra.mrb[0].mxu0 %v1345
    %v1961 = vpop.f32.mrb[0].mxu0
    %v1962 = vadd.f32 %v1457, %v1961
    %v1963 = vpop.f32.mrb[0].mxu0
    %v1964 = vpop.f32.mrb[0].mxu0
    %v1965 = vpop.f32.mrb[0].mxu0
    %1966 = vdwg.mxu0
    %1967 = vmatprep.subr.bf16.mxu0 0
    %1968 = vmatpush1.bf16.msra.mxu0 %v1751
    %1969 = vmatprep.subr.bf16.mxu0 0
    %1970 = vmatpush1.bf16.msra.mxu0 %v1754
    %1971 = vmatprep.subr.bf16.mxu0 0
    %1972 = vmatpush1.bf16.msra.mxu0 %v1757
    %1973 = vmatprep.subr.bf16.mxu0 0
    %1974 = vmatpush1.bf16.msra.mxu0 %v1760
    %1975 = vmatprep.subr.bf16.mxu0 0
    %1976 = vmatpush1.bf16.msra.mxu0 %v1763
    %1977 = vmatprep.subr.bf16.mxu0 0
    %1978 = vmatpush1.bf16.msra.mxu0 %v1766
    %1979 = vmatprep.subr.bf16.mxu0 0
    %1980 = vmatpush1.bf16.msra.mxu0 %v1769
    %1981 = vmatprep.subr.bf16.mxu0 0
    %1982 = vmatpush1.bf16.msra.mxu0 %v1772
    %1983 = vmatprep.subr.bf16.mxu0 0
    %1984 = vmatpush1.bf16.msra.mxu0 0
    %1985 = vmatprep.subr.bf16.mxu0 0
    %1986 = vmatpush1.bf16.msra.mxu0 0
    %1987 = vmatprep.subr.bf16.mxu0 0
    %1988 = vmatpush1.bf16.msra.mxu0 0
    %1989 = vmatprep.subr.bf16.mxu0 0
    %1990 = vmatpush1.bf16.msra.mxu0 0
    %1991 = vmatprep.subr.bf16.mxu0 0
    %1992 = vmatpush1.bf16.msra.mxu0 0
    %1993 = vmatprep.subr.bf16.mxu0 0
    %1994 = vmatpush1.bf16.msra.mxu0 0
    %1995 = vmatprep.subr.bf16.mxu0 0
    %1996 = vmatpush1.bf16.msra.mxu0 0
    %1997 = vmatprep.subr.bf16.mxu0 0
    %1998 = vmatpush1.bf16.msra.mxu0 0
    %1999 = vmatprep.mubr.bf16.mxu0 0
    %2000 = vmatmul.mubr.bf16.gmra.mrb[0].mxu0 %v1347
    %v2001 = vpop.f32.mrb[0].mxu0
    %v2002 = vadd.f32 %v1962, %v2001
    %v2003 = vpop.f32.mrb[0].mxu0
    %v2004 = vpop.f32.mrb[0].mxu0
    %v2005 = vpop.f32.mrb[0].mxu0
    %2006 = vdwg.mxu0
    %v2007 = vmax.f32 %v1921, 0.0
    %v2008 = vmax.f32 %v1923, 0.0
    %v2009 = vmax.f32 %v2002, 0.0
    %v2010 = vpack.c.bf16 %v2007, %v2007
    %v2011 = vpack.c.bf16 %v2008, %v2008
    %v2012 = vpack.c.bf16 %v2009, %v2009
    %v2013 = vld [vmem:[#allocation8] sm:$0xf]
    %v2014 = vld [vmem:[#allocation8 + $0x4] sm:$0xf]
    %v2015 = vld [vmem:[#allocation8 + $0x8] sm:$0xf]
    %v2016 = vld [vmem:[#allocation8 + $0xc] sm:$0xf]
    %v2017 = vld [vmem:[#allocation8 + $0x10] sm:$0xf]
    %v2018 = vld [vmem:[#allocation8 + $0x14] sm:$0xf]
    %v2019 = vld [vmem:[#allocation8 + $0x18] sm:$0xf]
    %v2020 = vld [vmem:[#allocation8 + $0x1c] sm:$0xf]
    %v2021 = vld [vmem:[#allocation8 + $0x20] sm:$0xf]
    %v2022 = vld [vmem:[#allocation8 + $0x24] sm:$0xf]
    %v2023 = vld [vmem:[#allocation8 + $0x28] sm:$0xf]
    %v2024 = vld [vmem:[#allocation8 + $0x2c] sm:$0xf]
    %v2025 = vld [vmem:[#allocation8 + $0x30] sm:$0xf]
    %v2026 = vld [vmem:[#allocation8 + $0x34] sm:$0xf]
    %v2027 = vld [vmem:[#allocation8 + $0x38] sm:$0xf]
    %v2028 = vld [vmem:[#allocation8 + $0x3c] sm:$0xf]
    %v2029 = vld [vmem:[#allocation8 + $0x40] sm:$0xf]
    %v2030 = vld [vmem:[#allocation8 + $0x44] sm:$0xf]
    %v2031 = vld [vmem:[#allocation8 + $0x48] sm:$0xf]
    %v2032 = vld [vmem:[#allocation8 + $0x4c] sm:$0xf]
    %v2033 = vld [vmem:[#allocation8 + $0x50] sm:$0xf]
    %v2034 = vld [vmem:[#allocation8 + $0x54] sm:$0xf]
    %v2035 = vld [vmem:[#allocation8 + $0x58] sm:$0xf]
    %v2036 = vld [vmem:[#allocation8 + $0x5c] sm:$0xf]
    %v2037 = vld [vmem:[#allocation8 + $0x60] sm:$0xf]
    %v2038 = vld [vmem:[#allocation8 + $0x64] sm:$0xf]
    %v2039 = vld [vmem:[#allocation8 + $0x68] sm:$0xf]
    %v2040 = vld [vmem:[#allocation8 + $0x6c] sm:$0xf]
    %v2041 = vld [vmem:[#allocation8 + $0x70] sm:$0xf]
    %v2042 = vld [vmem:[#allocation8 + $0x74] sm:$0xf]
    %v2043 = vld [vmem:[#allocation8 + $0x78] sm:$0xf]
    %v2044 = vld [vmem:[#allocation8 + $0x7c] sm:$0xf]
    %v2045 = vld [vmem:[#allocation8 + $0x80] sm:$0xf]
    %v2046 = vld [vmem:[#allocation8 + $0x84] sm:$0xf]
    %v2047 = vld [vmem:[#allocation8 + $0x88] sm:$0xf]
    %v2048 = vld [vmem:[#allocation8 + $0x8c] sm:$0xf]
    %v2049 = vld [vmem:[#allocation8 + $0x90] sm:$0xf]
    %v2050 = vld [vmem:[#allocation8 + $0x94] sm:$0xf]
    %v2051 = vld [vmem:[#allocation8 + $0x98] sm:$0xf]
    %v2052 = vld [vmem:[#allocation8 + $0x9c] sm:$0xf]
    %v2053 = vld [vmem:[#allocation8 + $0xa0] sm:$0xf]
    %v2054 = vld [vmem:[#allocation8 + $0xa4] sm:$0xf]
    %v2055 = vld [vmem:[#allocation8 + $0xa8] sm:$0xf]
    %v2056 = vld [vmem:[#allocation8 + $0xac] sm:$0xf]
    %v2057 = vld [vmem:[#allocation8 + $0xb0] sm:$0xf]
    %v2058 = vld [vmem:[#allocation8 + $0xb4] sm:$0xf]
    %v2059 = vld [vmem:[#allocation8 + $0xb8] sm:$0xf]
    %v2060 = vld [vmem:[#allocation8 + $0xbc] sm:$0xf]
    %v2061 = vld [vmem:[%s6] sm:$0x1]
    %v2063 = vlaneseq
    %v2064 = vshrl.u32 %v2063, 7
    %v2065 = vsub.s32 0, %v2064
    %v2066 = vrot.slane %v2061, %v2065
    %v2116 = vunpack.c.l.b16 %v2013
    %v2117 = vunpack.c.l.b16 %v2014
    %v2118 = vunpack.c.l.b16 %v2015
    %v2119 = vunpack.c.l.b16 %v2016
    %v2120 = vunpack.c.l.b16 %v2017
    %v2121 = vunpack.c.l.b16 %v2018
    %v2122 = vunpack.c.l.b16 %v2019
    %v2123 = vunpack.c.l.b16 %v2020
    %v2124 = vunpack.c.l.b16 %v2021
    %v2125 = vunpack.c.l.b16 %v2022
    %v2126 = vunpack.c.l.b16 %v2023
    %v2127 = vunpack.c.l.b16 %v2024
    %v2128 = vunpack.c.l.b16 %v2025
    %v2129 = vunpack.c.l.b16 %v2026
    %v2130 = vunpack.c.l.b16 %v2027
    %v2131 = vunpack.c.l.b16 %v2028
    %v2132 = vunpack.c.l.b16 %v2029
    %v2133 = vunpack.c.l.b16 %v2030
    %v2134 = vunpack.c.l.b16 %v2031
    %v2135 = vunpack.c.l.b16 %v2032
    %v2136 = vunpack.c.l.b16 %v2033
    %v2137 = vunpack.c.l.b16 %v2034
    %v2138 = vunpack.c.l.b16 %v2035
    %v2139 = vunpack.c.l.b16 %v2036
    %v2140 = vunpack.c.l.b16 %v2037
    %v2141 = vunpack.c.l.b16 %v2038
    %v2142 = vunpack.c.l.b16 %v2039
    %v2143 = vunpack.c.l.b16 %v2040
    %v2144 = vunpack.c.l.b16 %v2041
    %v2145 = vunpack.c.l.b16 %v2042
    %v2146 = vunpack.c.l.b16 %v2043
    %v2147 = vunpack.c.l.b16 %v2044
    %v2148 = vunpack.c.l.b16 %v2045
    %v2149 = vunpack.c.l.b16 %v2046
    %v2150 = vunpack.c.l.b16 %v2047
    %v2151 = vunpack.c.l.b16 %v2048
    %v2152 = vunpack.c.l.b16 %v2049
    %v2153 = vunpack.c.l.b16 %v2050
    %v2154 = vunpack.c.l.b16 %v2051
    %v2155 = vunpack.c.l.b16 %v2052
    %v2156 = vunpack.c.l.b16 %v2053
    %v2157 = vunpack.c.l.b16 %v2054
    %v2158 = vunpack.c.l.b16 %v2055
    %v2159 = vunpack.c.l.b16 %v2056
    %v2160 = vunpack.c.l.b16 %v2057
    %v2161 = vunpack.c.l.b16 %v2058
    %v2162 = vunpack.c.l.b16 %v2059
    %v2163 = vunpack.c.l.b16 %v2060
    %v2164 = vpack.c.b16 %v2117, %v2116
    %v2165 = vpack.c.b16 %v2119, %v2118
    %v2166 = vpack.c.b16 %v2121, %v2120
    %v2167 = vpack.c.b16 %v2123, %v2122
    %v2168 = vpack.c.b16 %v2125, %v2124
    %v2169 = vpack.c.b16 %v2127, %v2126
    %v2170 = vpack.c.b16 %v2129, %v2128
    %v2171 = vpack.c.b16 %v2131, %v2130
    %v2172 = vpack.c.b16 %v2133, %v2132
    %v2173 = vpack.c.b16 %v2135, %v2134
    %v2174 = vpack.c.b16 %v2137, %v2136
    %v2175 = vpack.c.b16 %v2139, %v2138
    %v2176 = vpack.c.b16 %v2141, %v2140
    %v2177 = vpack.c.b16 %v2143, %v2142
    %v2178 = vpack.c.b16 %v2145, %v2144
    %v2179 = vpack.c.b16 %v2147, %v2146
    %v2180 = vpack.c.b16 %v2149, %v2148
    %v2181 = vpack.c.b16 %v2151, %v2150
    %v2182 = vpack.c.b16 %v2153, %v2152
    %v2183 = vpack.c.b16 %v2155, %v2154
    %v2184 = vpack.c.b16 %v2157, %v2156
    %v2185 = vpack.c.b16 %v2159, %v2158
    %v2186 = vpack.c.b16 %v2161, %v2160
    %v2187 = vpack.c.b16 %v2163, %v2162
    %2212 = vmatprep.subr.bf16.mxu0 0
    %2213 = vmatpush1.bf16.msra.mxu0 %v2164
    %2214 = vmatprep.subr.bf16.mxu0 0
    %2215 = vmatpush1.bf16.msra.mxu0 %v2165
    %2216 = vmatprep.subr.bf16.mxu0 0
    %2217 = vmatpush1.bf16.msra.mxu0 %v2166
    %2218 = vmatprep.subr.bf16.mxu0 0
    %2219 = vmatpush1.bf16.msra.mxu0 %v2167
    %2220 = vmatprep.subr.bf16.mxu0 0
    %2221 = vmatpush1.bf16.msra.mxu0 %v2168
    %2222 = vmatprep.subr.bf16.mxu0 0
    %2223 = vmatpush1.bf16.msra.mxu0 %v2169
    %2224 = vmatprep.subr.bf16.mxu0 0
    %2225 = vmatpush1.bf16.msra.mxu0 %v2170
    %2226 = vmatprep.subr.bf16.mxu0 0
    %2227 = vmatpush1.bf16.msra.mxu0 %v2171
    %2228 = vmatprep.subr.bf16.mxu0 0
    %2229 = vmatpush1.bf16.msra.mxu0 %v2172
    %2230 = vmatprep.subr.bf16.mxu0 0
    %2231 = vmatpush1.bf16.msra.mxu0 %v2173
    %2232 = vmatprep.subr.bf16.mxu0 0
    %2233 = vmatpush1.bf16.msra.mxu0 %v2174
    %2234 = vmatprep.subr.bf16.mxu0 0
    %2235 = vmatpush1.bf16.msra.mxu0 %v2175
    %2236 = vmatprep.subr.bf16.mxu0 0
    %2237 = vmatpush1.bf16.msra.mxu0 %v2176
    %2238 = vmatprep.subr.bf16.mxu0 0
    %2239 = vmatpush1.bf16.msra.mxu0 %v2177
    %2240 = vmatprep.subr.bf16.mxu0 0
    %2241 = vmatpush1.bf16.msra.mxu0 %v2178
    %2242 = vmatprep.subr.bf16.mxu0 0
    %2243 = vmatpush1.bf16.msra.mxu0 %v2179
    %2244 = vmatprep.mubr.bf16.mxu0 %v2011
    %2245 = vmatmul.mubr.bf16.gmra.mrb[0].mxu0 %v2010
    %v2246 = vpop.f32.mrb[0].mxu0
    %v2247 = vadd.f32 %v2066, %v2246
    %v2248 = vpop.f32.mrb[0].mxu0
    %v2249 = vpop.f32.mrb[0].mxu0
    %v2250 = vpop.f32.mrb[0].mxu0
    %2251 = vdwg.mxu0
    %2252 = vmatprep.subr.bf16.mxu0 0
    %2253 = vmatpush1.bf16.msra.mxu0 %v2180
    %2254 = vmatprep.subr.bf16.mxu0 0
    %2255 = vmatpush1.bf16.msra.mxu0 %v2181
    %2256 = vmatprep.subr.bf16.mxu0 0
    %2257 = vmatpush1.bf16.msra.mxu0 %v2182
    %2258 = vmatprep.subr.bf16.mxu0 0
    %2259 = vmatpush1.bf16.msra.mxu0 %v2183
    %2260 = vmatprep.subr.bf16.mxu0 0
    %2261 = vmatpush1.bf16.msra.mxu0 %v2184
    %2262 = vmatprep.subr.bf16.mxu0 0
    %2263 = vmatpush1.bf16.msra.mxu0 %v2185
    %2264 = vmatprep.subr.bf16.mxu0 0
    %2265 = vmatpush1.bf16.msra.mxu0 %v2186
    %2266 = vmatprep.subr.bf16.mxu0 0
    %2267 = vmatpush1.bf16.msra.mxu0 %v2187
    %2268 = vmatprep.subr.bf16.mxu0 0
    %2269 = vmatpush1.bf16.msra.mxu0 0
    %2270 = vmatprep.subr.bf16.mxu0 0
    %2271 = vmatpush1.bf16.msra.mxu0 0
    %2272 = vmatprep.subr.bf16.mxu0 0
    %2273 = vmatpush1.bf16.msra.mxu0 0
    %2274 = vmatprep.subr.bf16.mxu0 0
    %2275 = vmatpush1.bf16.msra.mxu0 0
    %2276 = vmatprep.subr.bf16.mxu0 0
    %2277 = vmatpush1.bf16.msra.mxu0 0
    %2278 = vmatprep.subr.bf16.mxu0 0
    %2279 = vmatpush1.bf16.msra.mxu0 0
    %2280 = vmatprep.subr.bf16.mxu0 0
    %2281 = vmatpush1.bf16.msra.mxu0 0
    %2282 = vmatprep.subr.bf16.mxu0 0
    %2283 = vmatpush1.bf16.msra.mxu0 0
    %2284 = vmatprep.mubr.bf16.mxu0 0
    %2285 = vmatmul.mubr.bf16.gmra.mrb[0].mxu0 %v2012
    %v2286 = vpop.f32.mrb[0].mxu0
    %v2287 = vadd.f32 %v2247, %v2286
    %v2288 = vpop.f32.mrb[0].mxu0
    %v2289 = vpop.f32.mrb[0].mxu0
    %v2290 = vpop.f32.mrb[0].mxu0
    %2291 = vdwg.mxu0
    %v2292 = vpack.c.bf16 %v2287, %v2287
    %2293 = vst [vmem:[#allocation10] sm:$0x1] %v2292
    // Predicated region
    $region46: #{tpu_custom_call.1} parent=1 // pred_check
      _
    $region47: #{tpu_custom_call.1} parent=1 // pred_check_branch
      %2295 = sbr.rel (0) target = $region49
    $region48: #{tpu_custom_call.1} parent=1 // pred_region
      %s2297 = ssub.s32 16, 16
      %2298 = vsyncadd [#allocation4], %s2297
      %s2300 = sshll.u32 [#allocation10], 4
      %s2301 = int_to_ptr.vmem [resolvable:$true] %s2300
      %2303 = dma.vmem_to_hbm [thread:$0]  %s2301, 16, %s7, [#allocation4]
    $region49: #{tpu_custom_call.1} parent=1 // pred_fallthru
      _
    // Predicated region
    $region50: #{tpu_custom_call.1} parent=1 // pred_check
      _
    $region51: #{tpu_custom_call.1} parent=1 // pred_check_branch
      %2305 = sbr.rel (0) target = $region53
    $region52: #{tpu_custom_call.1} parent=1 // pred_region
      %2306 = dma.done [#allocation4], 16
    $region53: #{tpu_custom_call.1} parent=1 // pred_fallthru
      _
    %2307 = vsyncpa [#allocation3], 1
    %2308 = vsyncpa [#allocation6], 1
    %2309 = vsyncpa [#allocation9], 1
    %2310 = vsyncpa [#allocation4], 1

</llo_original>
